<compile_context>
chip_gen: v6e
topology: v6e:2x2x1
jax: 0.10.0
libtpu: 0.0.40
codegen_flags: <defaults>
</compile_context>

<pallas_src>
import functools

import jax
import jax.numpy as jnp
from jax import lax
from jax.experimental import pallas as pl
from jax.experimental.pallas import tpu as pltpu  # noqa: F401  (kept for TPU-specific params if tiled later)

QPAD = 128  # lane-dense width used for every matmul output and the kernel output


def spgat_fused_kernel(x_ref, adj_ref, w_all_ref, w_out_ref, out_ref,
                       *, alpha, nheads, hidden, q, n):
    f32, bf16 = jnp.float32, jnp.bfloat16
    hid_tot = nheads * hidden

    xb = x_ref[...].astype(bf16)                                  # (N, F_in)
    # adj arrives as int8 (4x smaller DMA than f32); widen before the compare so
    # the boolean mask is produced directly in 32-bit layout for the f32 selects.
    adj_nz = adj_ref[...].astype(jnp.int32) != 0                  # (N, N) bool

    # ---- single lane-dense projection (per-head W + folded attention vectors) ----
    # w_all columns: [0, hid_tot)                 per-head projections H_h
    #                [hid_tot, hid_tot+nh)        W_h @ a1_h  -> f1 columns
    #                [hid_tot+nh, hid_tot+2nh)    W_h @ a2_h  -> f2 columns
    h_all = jnp.dot(xb, w_all_ref[...], preferred_element_type=f32)   # (N, 128)

    # f2 rows for every head from ONE small sublane->lane transpose (XLU slot),
    # replacing the former lane-sparse dot_generals.
    att_t = jnp.transpose(h_all[:, hid_tot:hid_tot + 2 * nheads])     # (2*nh, N)

    col = lax.broadcasted_iota(jnp.int32, (n, QPAD), 1)               # reused below

    e_blocks, hbd_blocks = [], []
    for h in range(nheads):                 # nheads is tiny; unrolled at trace time
        f1 = h_all[:, hid_tot + h:hid_tot + h + 1]                    # (N, 1)
        f2 = att_t[nheads + h:nheads + h + 1, :]                      # (1, N)
        s = f1 + f2                                                   # (N, N)
        lrelu = jnp.where(s > 0, s, alpha * s)                        # LeakyReLU(alpha)
        e = jnp.where(adj_nz, jnp.exp(-lrelu), 0.0)                   # masked edge weights
        # Normalize BEFORE the bf16 cast / aggregation matmul: each row sums to 1,
        # keeping the bf16 operand well-scaled.  rowsum > 0 relies on the self-loop
        # invariant (matches the PyTorch reference, which NaNs on isolated nodes).
        rowsum = jnp.sum(e, axis=1, keepdims=True)                    # (N, 1)
        e_blocks.append(e * pl.reciprocal(rowsum, approx=True))
        # Block-diagonal slice of H: head-h columns of h_all, everything else zero.
        keep = (col >= h * hidden) & (col < (h + 1) * hidden)
        hbd_blocks.append(jnp.where(keep, h_all, 0.0))

    # ---- fused per-head aggregation: one (N, nh*N) @ (nh*N, 128) matmul --------
    e_all = jnp.concatenate(e_blocks, axis=1).astype(bf16)            # (N, nh*N)
    h_bd = jnp.concatenate(hbd_blocks, axis=0).astype(bf16)           # (nh*N, 128)
    h_cat = jnp.dot(e_all, h_bd, preferred_element_type=f32)          # (N, 128)
    h_cat = jnp.where(h_cat > 0, h_cat, jnp.exp(h_cat) - 1.0)         # ELU (concat heads)

    # ---- output attention layer (concat=False) ---------------------------------
    # w_out columns: [0, q) = W_out, q = W_out@a1_out, q+1 = W_out@a2_out, rest 0.
    h_out = jnp.dot(h_cat.astype(bf16), w_out_ref[...],
                    preferred_element_type=f32)                       # (N, 128)
    f1o = h_out[:, q:q + 1]                                           # (N, 1)
    f2o = jnp.transpose(h_out[:, q:q + 8])[1:2, :]                    # (1, N)
    so = f1o + f2o
    lrelu_o = jnp.where(so > 0, so, alpha * so)
    eo = jnp.where(adj_nz, jnp.exp(-lrelu_o), 0.0)
    rowsum_o = jnp.sum(eo, axis=1, keepdims=True)                     # (N, 1)
    eo = (eo * (1.0 / rowsum_o)).astype(bf16)       # exact reciprocal feeds log_softmax
    hpo = jnp.dot(eo, h_out.astype(bf16), preferred_element_type=f32)  # (N, 128)

    # ---- epilogue: log_softmax(elu(.), dim=1) over the real q columns ----------
    y = jnp.where(hpo > 0, hpo, jnp.exp(hpo) - 1.0)                   # ELU
    valid = col < q
    ym = jnp.where(valid, y, -jnp.inf)
    m = jnp.max(ym, axis=1, keepdims=True)
    lse = jnp.log(jnp.sum(jnp.exp(ym - m), axis=1, keepdims=True)) + m
    out_ref[...] = jnp.where(valid, y - lse, 0.0)


def spgat_forward(x, adj, W_heads, a_heads, W_out, a_out, alpha):
    nheads, F_in, hidden = W_heads.shape
    hid_tot = nheads * hidden
    N = x.shape[0]
    q = W_out.shape[1]
    f32 = jnp.float32
    assert hid_tot + 2 * nheads <= QPAD and q + 8 <= QPAD

    # ---- fold attention vectors into the (pre-cast bf16) weight slabs ----------
    W_all = jnp.transpose(W_heads, (1, 0, 2)).reshape(F_in, hid_tot)
    a1 = a_heads[:, 0, :hidden]                                 # (nheads, hidden)
    a2 = a_heads[:, 0, hidden:]
    f1_fold = jnp.einsum('hfk,hk->fh', W_heads, a1)             # (F_in, nheads)
    f2_fold = jnp.einsum('hfk,hk->fh', W_heads, a2)
    W_all_pad = (jnp.zeros((F_in, QPAD), f32)
                 .at[:, :hid_tot].set(W_all)
                 .at[:, hid_tot:hid_tot + nheads].set(f1_fold)
                 .at[:, hid_tot + nheads:hid_tot + 2 * nheads].set(f2_fold)
                 ).astype(jnp.bfloat16)

    f1o_fold = W_out @ a_out[:, :q].T                           # (hid_tot, 1)
    f2o_fold = W_out @ a_out[:, q:].T
    W_out_pad = (jnp.zeros((QPAD, QPAD), f32)
                 .at[:hid_tot, :q].set(W_out)
                 .at[:hid_tot, q].set(f1o_fold[:, 0])
                 .at[:hid_tot, q + 1].set(f2o_fold[:, 0])
                 ).astype(jnp.bfloat16)

    adj_i8 = (adj != 0).astype(jnp.int8)        # only N^2-sized input: 4x smaller DMA

    kernel = functools.partial(spgat_fused_kernel, alpha=alpha, nheads=nheads,
                               hidden=hidden, q=q, n=N)
    # Gridless call: every operand is tiny, so the whole graph lives in VMEM for a
    # single invocation (no pipeline prologue/epilogue overhead).
    # TODO(synk): for large N or batched graphs, add a leading "parallel" grid axis
    # (row tiles / graph batch) with BlockSpecs + pltpu.CompilerParams(vmem_limit_bytes)
    # so the kernel scales past VMEM (v7x has 64 MiB) and uses both v7x TensorCores.
    out_pad = pl.pallas_call(
        kernel,
        out_shape=jax.ShapeDtypeStruct((N, QPAD), f32),
    )(x, adj_i8, W_all_pad, W_out_pad)
    return out_pad[:, :q]


if __name__ == "__main__":
    # args: nu (nodes) = 64, ne (features) = 32, hidden = 16, nheads = 4, Q = 8, alpha = 0.2
    N, F_IN, HIDDEN, NHEADS, Q = 64, 32, 16, 4, 8
    ALPHA = 0.2

    key = jax.random.PRNGKey(0)
    keys = jax.random.split(key, 7)

    # Sparse node features -> dense (the torch module densifies the COO tensor;
    # here we synthesize the equivalent dense x directly as glue).
    feat = jax.random.normal(keys[0], (N, F_IN), jnp.float32)
    fmask = (jax.random.uniform(keys[1], (N, F_IN)) < 0.3).astype(jnp.float32)
    x = feat * fmask

    # Dense adjacency (the module densifies the scipy sparse adj); add self-loops so
    # every attention row has at least one edge.
    r = jax.random.uniform(keys[2], (N, N))
    adj = ((r + r.T) < 0.4).astype(jnp.float32)
    adj = jnp.maximum(adj, jnp.eye(N, dtype=jnp.float32))

    # Deterministic parameter init (xavier-style scaling).
    W_heads = jax.random.normal(keys[3], (NHEADS, F_IN, HIDDEN), jnp.float32) / jnp.sqrt(F_IN)
    a_heads = jax.random.normal(keys[4], (NHEADS, 1, 2 * HIDDEN), jnp.float32) * 0.1
    W_out = jax.random.normal(keys[5], (NHEADS * HIDDEN, Q), jnp.float32) / jnp.sqrt(NHEADS * HIDDEN)
    a_out = jax.random.normal(keys[6], (1, 2 * Q), jnp.float32) * 0.1

    # TODO(synk): dropout layers omitted — forward evaluated with training=False (identity).
    out = spgat_forward(x, adj, W_heads, a_heads, W_out, a_out, ALPHA)
    out = jax.block_until_ready(out)

    assert out.shape == (N, Q), out.shape
    assert bool(jnp.all(jnp.isfinite(out)))
    # rows of log_softmax should exponentiate-and-sum to ~1
    assert bool(jnp.allclose(jnp.sum(jnp.exp(out), axis=1), 1.0, atol=1e-4))
    print("KERNEL_OK")
</pallas_src>

<mosaic_0001>
module attributes {stable_mosaic.version = 11 : i64} {
  func.func @spgat_fused_kernel(%arg0: memref<64x32xf32, #tpu.memory_space<vmem>>, %arg1: memref<64x64xi8, #tpu.memory_space<vmem>>, %arg2: memref<32x128xbf16, #tpu.memory_space<vmem>>, %arg3: memref<128x128xbf16, #tpu.memory_space<vmem>>, %arg4: memref<64x128xf32, #tpu.memory_space<vmem>>) attributes {dimension_semantics = [], scalar_prefetch = 0 : i64, scratch_operands = 0 : i64, tpu.core_type = #tpu.core_type<tc>} {
    %c0 = arith.constant 0 : index
    %c0_0 = arith.constant 0 : index
    %0 = vector.load %arg0[%c0, %c0_0] : memref<64x32xf32, #tpu.memory_space<vmem>>, vector<64x32xf32>
    %1 = arith.truncf %0 : vector<64x32xf32> to vector<64x32xbf16>
    %c0_1 = arith.constant 0 : index
    %c0_2 = arith.constant 0 : index
    %2 = vector.load %arg1[%c0_1, %c0_2] : memref<64x64xi8, #tpu.memory_space<vmem>>, vector<64x64xi8>
    %3 = arith.extsi %2 : vector<64x64xi8> to vector<64x64xi32>
    %c0_i32 = arith.constant 0 : i32
    %4 = vector.broadcast %c0_i32 : i32 to vector<64x64xi32>
    %5 = arith.cmpi ne, %3, %4 : vector<64x64xi32>
    %c0_3 = arith.constant 0 : index
    %c0_4 = arith.constant 0 : index
    %6 = vector.load %arg2[%c0_3, %c0_4] : memref<32x128xbf16, #tpu.memory_space<vmem>>, vector<32x128xbf16>
    %cst = arith.constant dense<0.000000e+00> : vector<64x128xf32>
    %7 = tpu.matmul %1, %6, %cst {dimension_numbers = #tpu.dot_dimension_numbers<[1], [0], [0], [1], [0, 0, 1, 1], [], []>} : vector<64x32xbf16>, vector<32x128xbf16>, vector<64x128xf32> -> vector<64x128xf32>
    %8 = vector.extract_strided_slice %7 {offsets = [0, 64], sizes = [64, 8], strides = [1, 1]} : vector<64x128xf32> to vector<64x8xf32>
    %9 = tpu.transpose %8, [1, 0] : vector<64x8xf32> -> vector<8x64xf32>
    %10 = tpu.iota {dimensions = array<i32: 1>} : vector<64x128xi32>
    %11 = vector.extract_strided_slice %7 {offsets = [0, 64], sizes = [64, 1], strides = [1, 1]} : vector<64x128xf32> to vector<64x1xf32>
    %12 = vector.extract_strided_slice %9 {offsets = [4, 0], sizes = [1, 64], strides = [1, 1]} : vector<8x64xf32> to vector<1x64xf32>
    %13 = vector.broadcast %11 : vector<64x1xf32> to vector<64x64xf32>
    %14 = vector.broadcast %12 : vector<1x64xf32> to vector<64x64xf32>
    %15 = arith.addf %13, %14 : vector<64x64xf32>
    %cst_5 = arith.constant 0.000000e+00 : f32
    %16 = vector.broadcast %cst_5 : f32 to vector<64x64xf32>
    %17 = arith.cmpf ogt, %15, %16 : vector<64x64xf32>
    %cst_6 = arith.constant 2.000000e-01 : f32
    %18 = vector.broadcast %cst_6 : f32 to vector<64x64xf32>
    %19 = arith.mulf %18, %15 : vector<64x64xf32>
    %20 = arith.select %17, %15, %19 : vector<64x64xi1>, vector<64x64xf32>
    %cst_7 = arith.constant 0.000000e+00 : f32
    %21 = vector.broadcast %cst_7 : f32 to vector<64x64xf32>
    %22 = arith.subf %21, %20 : vector<64x64xf32>
    %23 = math.exp %22 : vector<64x64xf32>
    %cst_8 = arith.constant 0.000000e+00 : f32
    %24 = vector.broadcast %cst_8 : f32 to vector<64x64xf32>
    %25 = arith.select %5, %23, %24 : vector<64x64xi1>, vector<64x64xf32>
    %cst_9 = arith.constant dense<0.000000e+00> : vector<64xf32>
    %26 = vector.multi_reduction <add>, %25, %cst_9 [1] : vector<64x64xf32> to vector<64xf32>
    %27 = vector.shape_cast %26 : vector<64xf32> to vector<64x1xf32>
    %28 = tpu.reciprocal %27 {approx = true} : vector<64x1xf32> -> vector<64x1xf32>
    %29 = vector.broadcast %28 : vector<64x1xf32> to vector<64x64xf32>
    %30 = arith.mulf %25, %29 : vector<64x64xf32>
    %c0_i32_10 = arith.constant 0 : i32
    %31 = vector.broadcast %c0_i32_10 : i32 to vector<64x128xi32>
    %32 = arith.cmpi sge, %10, %31 : vector<64x128xi32>
    %c16_i32 = arith.constant 16 : i32
    %33 = vector.broadcast %c16_i32 : i32 to vector<64x128xi32>
    %34 = arith.cmpi slt, %10, %33 : vector<64x128xi32>
    %35 = arith.andi %32, %34 : vector<64x128xi1>
    %cst_11 = arith.constant 0.000000e+00 : f32
    %36 = vector.broadcast %cst_11 : f32 to vector<64x128xf32>
    %37 = arith.select %35, %7, %36 : vector<64x128xi1>, vector<64x128xf32>
    %38 = vector.extract_strided_slice %7 {offsets = [0, 65], sizes = [64, 1], strides = [1, 1]} : vector<64x128xf32> to vector<64x1xf32>
    %39 = vector.extract_strided_slice %9 {offsets = [5, 0], sizes = [1, 64], strides = [1, 1]} : vector<8x64xf32> to vector<1x64xf32>
    %40 = vector.broadcast %38 : vector<64x1xf32> to vector<64x64xf32>
    %41 = vector.broadcast %39 : vector<1x64xf32> to vector<64x64xf32>
    %42 = arith.addf %40, %41 : vector<64x64xf32>
    %cst_12 = arith.constant 0.000000e+00 : f32
    %43 = vector.broadcast %cst_12 : f32 to vector<64x64xf32>
    %44 = arith.cmpf ogt, %42, %43 : vector<64x64xf32>
    %cst_13 = arith.constant 2.000000e-01 : f32
    %45 = vector.broadcast %cst_13 : f32 to vector<64x64xf32>
    %46 = arith.mulf %45, %42 : vector<64x64xf32>
    %47 = arith.select %44, %42, %46 : vector<64x64xi1>, vector<64x64xf32>
    %cst_14 = arith.constant 0.000000e+00 : f32
    %48 = vector.broadcast %cst_14 : f32 to vector<64x64xf32>
    %49 = arith.subf %48, %47 : vector<64x64xf32>
    %50 = math.exp %49 : vector<64x64xf32>
    %cst_15 = arith.constant 0.000000e+00 : f32
    %51 = vector.broadcast %cst_15 : f32 to vector<64x64xf32>
    %52 = arith.select %5, %50, %51 : vector<64x64xi1>, vector<64x64xf32>
    %cst_16 = arith.constant dense<0.000000e+00> : vector<64xf32>
    %53 = vector.multi_reduction <add>, %52, %cst_16 [1] : vector<64x64xf32> to vector<64xf32>
    %54 = vector.shape_cast %53 : vector<64xf32> to vector<64x1xf32>
    %55 = tpu.reciprocal %54 {approx = true} : vector<64x1xf32> -> vector<64x1xf32>
    %56 = vector.broadcast %55 : vector<64x1xf32> to vector<64x64xf32>
    %57 = arith.mulf %52, %56 : vector<64x64xf32>
    %c16_i32_17 = arith.constant 16 : i32
    %58 = vector.broadcast %c16_i32_17 : i32 to vector<64x128xi32>
    %59 = arith.cmpi sge, %10, %58 : vector<64x128xi32>
    %c32_i32 = arith.constant 32 : i32
    %60 = vector.broadcast %c32_i32 : i32 to vector<64x128xi32>
    %61 = arith.cmpi slt, %10, %60 : vector<64x128xi32>
    %62 = arith.andi %59, %61 : vector<64x128xi1>
    %cst_18 = arith.constant 0.000000e+00 : f32
    %63 = vector.broadcast %cst_18 : f32 to vector<64x128xf32>
    %64 = arith.select %62, %7, %63 : vector<64x128xi1>, vector<64x128xf32>
    %65 = vector.extract_strided_slice %7 {offsets = [0, 66], sizes = [64, 1], strides = [1, 1]} : vector<64x128xf32> to vector<64x1xf32>
    %66 = vector.extract_strided_slice %9 {offsets = [6, 0], sizes = [1, 64], strides = [1, 1]} : vector<8x64xf32> to vector<1x64xf32>
    %67 = vector.broadcast %65 : vector<64x1xf32> to vector<64x64xf32>
    %68 = vector.broadcast %66 : vector<1x64xf32> to vector<64x64xf32>
    %69 = arith.addf %67, %68 : vector<64x64xf32>
    %cst_19 = arith.constant 0.000000e+00 : f32
    %70 = vector.broadcast %cst_19 : f32 to vector<64x64xf32>
    %71 = arith.cmpf ogt, %69, %70 : vector<64x64xf32>
    %cst_20 = arith.constant 2.000000e-01 : f32
    %72 = vector.broadcast %cst_20 : f32 to vector<64x64xf32>
    %73 = arith.mulf %72, %69 : vector<64x64xf32>
    %74 = arith.select %71, %69, %73 : vector<64x64xi1>, vector<64x64xf32>
    %cst_21 = arith.constant 0.000000e+00 : f32
    %75 = vector.broadcast %cst_21 : f32 to vector<64x64xf32>
    %76 = arith.subf %75, %74 : vector<64x64xf32>
    %77 = math.exp %76 : vector<64x64xf32>
    %cst_22 = arith.constant 0.000000e+00 : f32
    %78 = vector.broadcast %cst_22 : f32 to vector<64x64xf32>
    %79 = arith.select %5, %77, %78 : vector<64x64xi1>, vector<64x64xf32>
    %cst_23 = arith.constant dense<0.000000e+00> : vector<64xf32>
    %80 = vector.multi_reduction <add>, %79, %cst_23 [1] : vector<64x64xf32> to vector<64xf32>
    %81 = vector.shape_cast %80 : vector<64xf32> to vector<64x1xf32>
    %82 = tpu.reciprocal %81 {approx = true} : vector<64x1xf32> -> vector<64x1xf32>
    %83 = vector.broadcast %82 : vector<64x1xf32> to vector<64x64xf32>
    %84 = arith.mulf %79, %83 : vector<64x64xf32>
    %c32_i32_24 = arith.constant 32 : i32
    %85 = vector.broadcast %c32_i32_24 : i32 to vector<64x128xi32>
    %86 = arith.cmpi sge, %10, %85 : vector<64x128xi32>
    %c48_i32 = arith.constant 48 : i32
    %87 = vector.broadcast %c48_i32 : i32 to vector<64x128xi32>
    %88 = arith.cmpi slt, %10, %87 : vector<64x128xi32>
    %89 = arith.andi %86, %88 : vector<64x128xi1>
    %cst_25 = arith.constant 0.000000e+00 : f32
    %90 = vector.broadcast %cst_25 : f32 to vector<64x128xf32>
    %91 = arith.select %89, %7, %90 : vector<64x128xi1>, vector<64x128xf32>
    %92 = vector.extract_strided_slice %7 {offsets = [0, 67], sizes = [64, 1], strides = [1, 1]} : vector<64x128xf32> to vector<64x1xf32>
    %93 = vector.extract_strided_slice %9 {offsets = [7, 0], sizes = [1, 64], strides = [1, 1]} : vector<8x64xf32> to vector<1x64xf32>
    %94 = vector.broadcast %92 : vector<64x1xf32> to vector<64x64xf32>
    %95 = vector.broadcast %93 : vector<1x64xf32> to vector<64x64xf32>
    %96 = arith.addf %94, %95 : vector<64x64xf32>
    %cst_26 = arith.constant 0.000000e+00 : f32
    %97 = vector.broadcast %cst_26 : f32 to vector<64x64xf32>
    %98 = arith.cmpf ogt, %96, %97 : vector<64x64xf32>
    %cst_27 = arith.constant 2.000000e-01 : f32
    %99 = vector.broadcast %cst_27 : f32 to vector<64x64xf32>
    %100 = arith.mulf %99, %96 : vector<64x64xf32>
    %101 = arith.select %98, %96, %100 : vector<64x64xi1>, vector<64x64xf32>
    %cst_28 = arith.constant 0.000000e+00 : f32
    %102 = vector.broadcast %cst_28 : f32 to vector<64x64xf32>
    %103 = arith.subf %102, %101 : vector<64x64xf32>
    %104 = math.exp %103 : vector<64x64xf32>
    %cst_29 = arith.constant 0.000000e+00 : f32
    %105 = vector.broadcast %cst_29 : f32 to vector<64x64xf32>
    %106 = arith.select %5, %104, %105 : vector<64x64xi1>, vector<64x64xf32>
    %cst_30 = arith.constant dense<0.000000e+00> : vector<64xf32>
    %107 = vector.multi_reduction <add>, %106, %cst_30 [1] : vector<64x64xf32> to vector<64xf32>
    %108 = vector.shape_cast %107 : vector<64xf32> to vector<64x1xf32>
    %109 = tpu.reciprocal %108 {approx = true} : vector<64x1xf32> -> vector<64x1xf32>
    %110 = vector.broadcast %109 : vector<64x1xf32> to vector<64x64xf32>
    %111 = arith.mulf %106, %110 : vector<64x64xf32>
    %c48_i32_31 = arith.constant 48 : i32
    %112 = vector.broadcast %c48_i32_31 : i32 to vector<64x128xi32>
    %113 = arith.cmpi sge, %10, %112 : vector<64x128xi32>
    %c64_i32 = arith.constant 64 : i32
    %114 = vector.broadcast %c64_i32 : i32 to vector<64x128xi32>
    %115 = arith.cmpi slt, %10, %114 : vector<64x128xi32>
    %116 = arith.andi %113, %115 : vector<64x128xi1>
    %cst_32 = arith.constant 0.000000e+00 : f32
    %117 = vector.broadcast %cst_32 : f32 to vector<64x128xf32>
    %118 = arith.select %116, %7, %117 : vector<64x128xi1>, vector<64x128xf32>
    %119 = tpu.concatenate %30, %57, %84, %111 in 1 : vector<64x64xf32>, vector<64x64xf32>, vector<64x64xf32>, vector<64x64xf32> -> vector<64x256xf32>
    %120 = arith.truncf %119 : vector<64x256xf32> to vector<64x256xbf16>
    %121 = tpu.concatenate %37, %64, %91, %118 in 0 : vector<64x128xf32>, vector<64x128xf32>, vector<64x128xf32>, vector<64x128xf32> -> vector<256x128xf32>
    %122 = arith.truncf %121 : vector<256x128xf32> to vector<256x128xbf16>
    %cst_33 = arith.constant dense<0.000000e+00> : vector<64x128xf32>
    %123 = tpu.matmul %120, %122, %cst_33 {dimension_numbers = #tpu.dot_dimension_numbers<[1], [0], [0], [1], [0, 0, 1, 1], [], []>} : vector<64x256xbf16>, vector<256x128xbf16>, vector<64x128xf32> -> vector<64x128xf32>
    %cst_34 = arith.constant 0.000000e+00 : f32
    %124 = vector.broadcast %cst_34 : f32 to vector<64x128xf32>
    %125 = arith.cmpf ogt, %123, %124 : vector<64x128xf32>
    %126 = math.exp %123 : vector<64x128xf32>
    %cst_35 = arith.constant 1.000000e+00 : f32
    %127 = vector.broadcast %cst_35 : f32 to vector<64x128xf32>
    %128 = arith.subf %126, %127 : vector<64x128xf32>
    %129 = arith.select %125, %123, %128 : vector<64x128xi1>, vector<64x128xf32>
    %130 = arith.truncf %129 : vector<64x128xf32> to vector<64x128xbf16>
    %c0_36 = arith.constant 0 : index
    %c0_37 = arith.constant 0 : index
    %131 = vector.load %arg3[%c0_36, %c0_37] : memref<128x128xbf16, #tpu.memory_space<vmem>>, vector<128x128xbf16>
    %cst_38 = arith.constant dense<0.000000e+00> : vector<64x128xf32>
    %132 = tpu.matmul %130, %131, %cst_38 {dimension_numbers = #tpu.dot_dimension_numbers<[1], [0], [0], [1], [0, 0, 1, 1], [], []>} : vector<64x128xbf16>, vector<128x128xbf16>, vector<64x128xf32> -> vector<64x128xf32>
    %133 = vector.extract_strided_slice %132 {offsets = [0, 8], sizes = [64, 1], strides = [1, 1]} : vector<64x128xf32> to vector<64x1xf32>
    %134 = vector.extract_strided_slice %132 {offsets = [0, 8], sizes = [64, 8], strides = [1, 1]} : vector<64x128xf32> to vector<64x8xf32>
    %135 = tpu.transpose %134, [1, 0] : vector<64x8xf32> -> vector<8x64xf32>
    %136 = vector.extract_strided_slice %135 {offsets = [1, 0], sizes = [1, 64], strides = [1, 1]} : vector<8x64xf32> to vector<1x64xf32>
    %137 = vector.broadcast %133 : vector<64x1xf32> to vector<64x64xf32>
    %138 = vector.broadcast %136 : vector<1x64xf32> to vector<64x64xf32>
    %139 = arith.addf %137, %138 : vector<64x64xf32>
    %cst_39 = arith.constant 0.000000e+00 : f32
    %140 = vector.broadcast %cst_39 : f32 to vector<64x64xf32>
    %141 = arith.cmpf ogt, %139, %140 : vector<64x64xf32>
    %cst_40 = arith.constant 2.000000e-01 : f32
    %142 = vector.broadcast %cst_40 : f32 to vector<64x64xf32>
    %143 = arith.mulf %142, %139 : vector<64x64xf32>
    %144 = arith.select %141, %139, %143 : vector<64x64xi1>, vector<64x64xf32>
    %cst_41 = arith.constant 0.000000e+00 : f32
    %145 = vector.broadcast %cst_41 : f32 to vector<64x64xf32>
    %146 = arith.subf %145, %144 : vector<64x64xf32>
    %147 = math.exp %146 : vector<64x64xf32>
    %cst_42 = arith.constant 0.000000e+00 : f32
    %148 = vector.broadcast %cst_42 : f32 to vector<64x64xf32>
    %149 = arith.select %5, %147, %148 : vector<64x64xi1>, vector<64x64xf32>
    %cst_43 = arith.constant dense<0.000000e+00> : vector<64xf32>
    %150 = vector.multi_reduction <add>, %149, %cst_43 [1] : vector<64x64xf32> to vector<64xf32>
    %151 = vector.shape_cast %150 : vector<64xf32> to vector<64x1xf32>
    %cst_44 = arith.constant 1.000000e+00 : f32
    %152 = vector.broadcast %cst_44 : f32 to vector<64x1xf32>
    %153 = arith.divf %152, %151 : vector<64x1xf32>
    %154 = vector.broadcast %153 : vector<64x1xf32> to vector<64x64xf32>
    %155 = arith.mulf %149, %154 : vector<64x64xf32>
    %156 = arith.truncf %155 : vector<64x64xf32> to vector<64x64xbf16>
    %157 = arith.truncf %132 : vector<64x128xf32> to vector<64x128xbf16>
    %cst_45 = arith.constant dense<0.000000e+00> : vector<64x128xf32>
    %158 = tpu.matmul %156, %157, %cst_45 {dimension_numbers = #tpu.dot_dimension_numbers<[1], [0], [0], [1], [0, 0, 1, 1], [], []>} : vector<64x64xbf16>, vector<64x128xbf16>, vector<64x128xf32> -> vector<64x128xf32>
    %cst_46 = arith.constant 0.000000e+00 : f32
    %159 = vector.broadcast %cst_46 : f32 to vector<64x128xf32>
    %160 = arith.cmpf ogt, %158, %159 : vector<64x128xf32>
    %161 = math.exp %158 : vector<64x128xf32>
    %cst_47 = arith.constant 1.000000e+00 : f32
    %162 = vector.broadcast %cst_47 : f32 to vector<64x128xf32>
    %163 = arith.subf %161, %162 : vector<64x128xf32>
    %164 = arith.select %160, %158, %163 : vector<64x128xi1>, vector<64x128xf32>
    %c8_i32 = arith.constant 8 : i32
    %165 = vector.broadcast %c8_i32 : i32 to vector<64x128xi32>
    %166 = arith.cmpi slt, %10, %165 : vector<64x128xi32>
    %cst_48 = arith.constant 0xFF800000 : f32
    %167 = vector.broadcast %cst_48 : f32 to vector<64x128xf32>
    %168 = arith.select %166, %164, %167 : vector<64x128xi1>, vector<64x128xf32>
    %cst_49 = arith.constant dense<0xFF800000> : vector<64xf32>
    %169 = vector.multi_reduction <maximumf>, %168, %cst_49 [1] : vector<64x128xf32> to vector<64xf32>
    %170 = vector.shape_cast %169 : vector<64xf32> to vector<64x1xf32>
    %171 = vector.broadcast %170 : vector<64x1xf32> to vector<64x128xf32>
    %172 = arith.subf %168, %171 : vector<64x128xf32>
    %173 = math.exp %172 : vector<64x128xf32>
    %cst_50 = arith.constant dense<0.000000e+00> : vector<64xf32>
    %174 = vector.multi_reduction <add>, %173, %cst_50 [1] : vector<64x128xf32> to vector<64xf32>
    %175 = vector.shape_cast %174 : vector<64xf32> to vector<64x1xf32>
    %176 = math.log %175 : vector<64x1xf32>
    %177 = arith.addf %176, %170 : vector<64x1xf32>
    %178 = vector.broadcast %177 : vector<64x1xf32> to vector<64x128xf32>
    %179 = arith.subf %164, %178 : vector<64x128xf32>
    %cst_51 = arith.constant 0.000000e+00 : f32
    %180 = vector.broadcast %cst_51 : f32 to vector<64x128xf32>
    %181 = arith.select %166, %179, %180 : vector<64x128xi1>, vector<64x128xf32>
    %c0_52 = arith.constant 0 : index
    %c0_53 = arith.constant 0 : index
    %182 = vector.load %arg4[%c0_52, %c0_53] : memref<64x128xf32, #tpu.memory_space<vmem>>, vector<64x128xf32>
    tpu.vector_store %arg4[%c0_52, %c0_53], %181 {strides = array<i32>} : memref<64x128xf32, #tpu.memory_space<vmem>>, vector<64x128xf32>,
    return
  }
}

</mosaic_0001>

<llo_original>
// kernel: tpu_custom_call.1
$region0: #{tpu_custom_call.1}
  #allocation0 [shape = 'u32[]', space=smem, size = 0x4, offset = 0x4, fixed_abs, tag = 'smem constant byte address 0x4 - core index']
  #allocation1 [shape = 'u32[144,128]{1,0:T(1,128)}', space=vmem, size = 0x12000, scoped, tag = 'internal scratch']
  %s0 = inlined_call_operand.vmem [shape: f32[64,32], index: 0, kind: input, shape index: {}]
  %s1 = inlined_call_operand.vmem [shape: s8[64,64], index: 1, kind: input, shape index: {}]
  %s2 = inlined_call_operand.vmem [shape: bf16[32,128], index: 2, kind: input, shape index: {}]
  %s3 = inlined_call_operand.vmem [shape: bf16[128,128], index: 3, kind: input, shape index: {}]
  %s4 = inlined_call_operand.hbm [shape: f32[64,128], index: 4, kind: output, shape index: {}]
  %s5 = sld [smem:[#allocation0]]
  $region26: #{tpu_custom_call.1} parent=0
    _
  %s7 = ssub.s32 1, %s5
  %s8 = scalar_select 0, %s7, %s5
  $region1: #{tpu_custom_call.1} parent=0
    #allocation2 [shape = 'u8[32768]{0}', space=vmem, size = 0x8000, scoped, tag = 'output window, operand 0, single buffered']
    #allocation3 [shape = 's32[1]{0}', space=sflag, size = 0x4, scoped, tag = 'scoped memory for tpu_custom_call.1']
    %9 = vsyncpa [#allocation3], 0
    // Predicated region
    $region2: #{tpu_custom_call.1} parent=1 // pred_check
      _
    $region3: #{tpu_custom_call.1} parent=1 // pred_check_branch
      %11 = sbr.rel (0) target = $region5
    $region4: #{tpu_custom_call.1} parent=1 // pred_region
      _
    $region5: #{tpu_custom_call.1} parent=1 // pred_fallthru
      _
    // Predicated region
    $region6: #{tpu_custom_call.1} parent=1 // pred_check
      _
    $region7: #{tpu_custom_call.1} parent=1 // pred_check_branch
      %13 = sbr.rel (0) target = $region9
    $region8: #{tpu_custom_call.1} parent=1 // pred_region
      _
    $region9: #{tpu_custom_call.1} parent=1 // pred_fallthru
      _
    // Predicated region
    $region10: #{tpu_custom_call.1} parent=1 // pred_check
      _
    $region11: #{tpu_custom_call.1} parent=1 // pred_check_branch
      %15 = sbr.rel (0) target = $region13
    $region12: #{tpu_custom_call.1} parent=1 // pred_region
      _
    $region13: #{tpu_custom_call.1} parent=1 // pred_fallthru
      _
    // Predicated region
    $region14: #{tpu_custom_call.1} parent=1 // pred_check
      _
    $region15: #{tpu_custom_call.1} parent=1 // pred_check_branch
      %17 = sbr.rel (0) target = $region17
    $region16: #{tpu_custom_call.1} parent=1 // pred_region
      _
    $region17: #{tpu_custom_call.1} parent=1 // pred_fallthru
      _
    %v19 = vld [vmem:[%s0] sm:$0xff]
    %v20 = vld [vmem:[%s0 + $0x8] sm:$0xff]
    %v21 = vld [vmem:[%s0 + $0x10] sm:$0xff]
    %v22 = vld [vmem:[%s0 + $0x18] sm:$0xff]
    %v23 = vld [vmem:[%s0 + $0x20] sm:$0xff]
    %v24 = vld [vmem:[%s0 + $0x28] sm:$0xff]
    %v25 = vld [vmem:[%s0 + $0x30] sm:$0xff]
    %v26 = vld [vmem:[%s0 + $0x38] sm:$0xff]
    %v27 = vpack.c.bf16 %v20, %v19
    %v28 = vpack.c.bf16 %v22, %v21
    %v29 = vpack.c.bf16 %v24, %v23
    %v30 = vpack.c.bf16 %v26, %v25
    %v31 = vld [vmem:[%s1] sm:$0xff]
    %v32 = vld [vmem:[%s1 + $0x8] sm:$0xff]
    %v33 = vunpack.c.0.s8 %v31
    %v34 = vunpack.c.1.s8 %v31
    %v35 = vunpack.c.2.s8 %v31
    %v36 = vunpack.c.3.s8 %v31
    %v37 = vunpack.c.0.s8 %v32
    %v38 = vunpack.c.1.s8 %v32
    %v39 = vunpack.c.2.s8 %v32
    %v40 = vunpack.c.3.s8 %v32
    %vm41 = vcmp.ne.s32.totalorder %v33, 0
    %vm42 = vcmp.ne.s32.totalorder %v34, 0
    %vm43 = vcmp.ne.s32.totalorder %v35, 0
    %vm44 = vcmp.ne.s32.totalorder %v36, 0
    %vm45 = vcmp.ne.s32.totalorder %v37, 0
    %vm46 = vcmp.ne.s32.totalorder %v38, 0
    %vm47 = vcmp.ne.s32.totalorder %v39, 0
    %vm48 = vcmp.ne.s32.totalorder %v40, 0
    %v49 = vld [vmem:[%s2] sm:$0xf]
    %v50 = vld [vmem:[%s2 + $0x4] sm:$0xf]
    %v51 = vld [vmem:[%s2 + $0x8] sm:$0xf]
    %v52 = vld [vmem:[%s2 + $0xc] sm:$0xf]
    %v57 = vunpack.c.l.b16 %v49
    %v58 = vunpack.c.l.b16 %v50
    %v59 = vunpack.c.l.b16 %v51
    %v60 = vunpack.c.l.b16 %v52
    %v61 = vpack.c.b16 %v58, %v57
    %v62 = vpack.c.b16 %v60, %v59
    %vm65 = vcmask 261120
    %v67 = vsel %vm65, %v27, 0
    %v70 = vsel %vm65, %v28, 0
    %v73 = vsel %vm65, %v29, 0
    %v76 = vsel %vm65, %v30, 0
    %78 = vmatprep.subr.bf16.mxu0 0
    %79 = vmatpush1.bf16.msra.mxu0 0
    %80 = vmatprep.subr.bf16.mxu0 0
    %81 = vmatpush1.bf16.msra.mxu0 0
    %82 = vmatprep.subr.bf16.mxu0 0
    %83 = vmatpush1.bf16.msra.mxu0 0
    %84 = vmatprep.subr.bf16.mxu0 0
    %85 = vmatpush1.bf16.msra.mxu0 0
    %86 = vmatprep.subr.bf16.mxu0 0
    %87 = vmatpush1.bf16.msra.mxu0 0
    %88 = vmatprep.subr.bf16.mxu0 0
    %89 = vmatpush1.bf16.msra.mxu0 0
    %90 = vmatprep.subr.bf16.mxu0 0
    %91 = vmatpush1.bf16.msra.mxu0 %v62
    %92 = vmatprep.subr.bf16.mxu0 0
    %93 = vmatpush1.bf16.msra.mxu0 %v61
    %94 = vmatprep.subr.bf16.mxu0 0
    %95 = vmatpush2.bf16.msra.mxu0 0
    %96 = vmatprep.subr.bf16.mxu0 0
    %97 = vmatpush2.bf16.msra.mxu0 0
    %98 = vmatprep.subr.bf16.mxu0 0
    %99 = vmatpush2.bf16.msra.mxu0 0
    %100 = vmatprep.subr.bf16.mxu0 0
    %101 = vmatpush2.bf16.msra.mxu0 0
    %102 = vmatprep.subr.bf16.mxu0 0
    %103 = vmatpush2.bf16.msra.mxu0 0
    %104 = vmatprep.subr.bf16.mxu0 0
    %105 = vmatpush2.bf16.msra.mxu0 0
    %106 = vmatprep.subr.bf16.mxu0 0
    %107 = vmatpush2.bf16.msra.mxu0 0
    %108 = vmatprep.subr.bf16.mxu0 0
    %109 = vmatpush2.bf16.msra.mxu0 0
    %110 = vmatprep.mubr.bf16.mxu0 0
    %111 = vmatmul.mubr.bf16.gmra.mxu0 %v67
    %v112 = vpop.f32.mrf.mxu0
    %v113 = vadd.f32 0.0, %v112
    %v114 = vpop.f32.mrf.mxu0
    %v115 = vpop.f32.mrf.mxu0
    %v116 = vadd.f32 0.0, %v115
    %v117 = vpop.f32.mrf.mxu0
    %118 = vmatprep.mubr.bf16.mxu0 0
    %119 = vmatmul.mubr.bf16.gmra.mxu0 %v70
    %v120 = vpop.f32.mrf.mxu0
    %v121 = vadd.f32 0.0, %v120
    %v122 = vpop.f32.mrf.mxu0
    %v123 = vpop.f32.mrf.mxu0
    %v124 = vadd.f32 0.0, %v123
    %v125 = vpop.f32.mrf.mxu0
    %126 = vmatprep.mubr.bf16.mxu0 0
    %127 = vmatmul.mubr.bf16.gmra.mxu0 %v73
    %v128 = vpop.f32.mrf.mxu0
    %v129 = vadd.f32 0.0, %v128
    %v130 = vpop.f32.mrf.mxu0
    %v131 = vpop.f32.mrf.mxu0
    %v132 = vadd.f32 0.0, %v131
    %v133 = vpop.f32.mrf.mxu0
    %134 = vmatprep.mubr.bf16.mxu0 0
    %135 = vmatmul.mubr.bf16.gmra.mxu0 %v76
    %v136 = vpop.f32.mrf.mxu0
    %v137 = vadd.f32 0.0, %v136
    %v138 = vpop.f32.mrf.mxu0
    %v139 = vpop.f32.mrf.mxu0
    %v140 = vadd.f32 0.0, %v139
    %v141 = vpop.f32.mrf.mxu0
    %142 = vdwg.mxu0
    %151 = vrot.lane.b32.xlu0 %v113, 64
    %v152 = vpop.permute.xlu0 %151
    %153 = vrot.lane.b32.xlu0 %v116, 64
    %v154 = vpop.permute.xlu0 %153
    %155 = vrot.lane.b32.xlu0 %v121, 64
    %v156 = vpop.permute.xlu0 %155
    %157 = vrot.lane.b32.xlu0 %v124, 64
    %v158 = vpop.permute.xlu0 %157
    %159 = vrot.lane.b32.xlu0 %v129, 64
    %v160 = vpop.permute.xlu0 %159
    %161 = vrot.lane.b32.xlu0 %v132, 64
    %v162 = vpop.permute.xlu0 %161
    %163 = vrot.lane.b32.xlu0 %v137, 64
    %v164 = vpop.permute.xlu0 %163
    %165 = vrot.lane.b32.xlu0 %v140, 64
    %v166 = vpop.permute.xlu0 %165
    %175 = vxpose.xlu0.b32.start [1/16] %v152, 128
    %176 = vxpose.xlu0.b32.cont [2/16] %v154, 128
    %177 = vxpose.xlu0.b32.cont [3/16] %v156, 128
    %178 = vxpose.xlu0.b32.cont [4/16] %v158, 128
    %179 = vxpose.xlu0.b32.cont [5/16] %v160, 128
    %180 = vxpose.xlu0.b32.cont [6/16] %v162, 128
    %181 = vxpose.xlu0.b32.cont [7/16] %v164, 128
    %182 = vxpose.xlu0.b32.cont [8/16] %v166, 128
    %183 = vxpose.xlu0.b32.cont [9/16] 0.0, 128
    %184 = vxpose.xlu0.b32.cont [10/16] 0.0, 128
    %185 = vxpose.xlu0.b32.cont [11/16] 0.0, 128
    %186 = vxpose.xlu0.b32.cont [12/16] 0.0, 128
    %187 = vxpose.xlu0.b32.cont [13/16] 0.0, 128
    %188 = vxpose.xlu0.b32.cont [14/16] 0.0, 128
    %189 = vxpose.xlu0.b32.cont [15/16] 0.0, 128
    %190 = vxpose.xlu0.b32.end [16/16] 0.0, 128
    %v191 = vpop.trf.xlu0
    %v192 = vpop.trf.xlu0
    %v193 = vpop.trf.xlu0
    %v194 = vpop.trf.xlu0
    %v195 = vpop.trf.xlu0
    %v196 = vpop.trf.xlu0
    %v197 = vpop.trf.xlu0
    %v198 = vpop.trf.xlu0
    %v199 = vpop.trf.xlu0
    %v200 = vpop.trf.xlu0
    %v201 = vpop.trf.xlu0
    %v202 = vpop.trf.xlu0
    %v203 = vpop.trf.xlu0
    %v204 = vpop.trf.xlu0
    %v205 = vpop.trf.xlu0
    %v206 = vpop.trf.xlu0
    %v207 = vlaneseq
    %v208 = vand.u32 %v207, 127
    %209 = vset.pattern.permute.xlu0 64
    %210 = vperm.xlu0 %209, %v113
    %v211 = vpop.permute.xlu0 %210
    %213 = vset.pattern.permute.xlu0 64
    %214 = vperm.xlu0 %213, %v116
    %v215 = vpop.permute.xlu0 %214
    %217 = vset.pattern.permute.xlu0 64
    %218 = vperm.xlu0 %217, %v121
    %v219 = vpop.permute.xlu0 %218
    %221 = vset.pattern.permute.xlu0 64
    %222 = vperm.xlu0 %221, %v124
    %v223 = vpop.permute.xlu0 %222
    %225 = vset.pattern.permute.xlu0 64
    %226 = vperm.xlu0 %225, %v129
    %v227 = vpop.permute.xlu0 %226
    %229 = vset.pattern.permute.xlu0 64
    %230 = vperm.xlu0 %229, %v132
    %v231 = vpop.permute.xlu0 %230
    %233 = vset.pattern.permute.xlu0 64
    %234 = vperm.xlu0 %233, %v137
    %v235 = vpop.permute.xlu0 %234
    %237 = vset.pattern.permute.xlu0 64
    %238 = vperm.xlu0 %237, %v140
    %v239 = vpop.permute.xlu0 %238
    %v241 = vlaneseq
    %v242 = vshrl.u32 %v241, 7
    %v243 = vsub.s32 4, %v242
    %v244 = vrot.slane %v191, %v243
    %v245 = vadd.f32 %v211, %v244
    %v246 = vadd.f32 %v215, %v244
    %v247 = vadd.f32 %v219, %v244
    %v248 = vadd.f32 %v223, %v244
    %v249 = vadd.f32 %v227, %v244
    %v250 = vadd.f32 %v231, %v244
    %v251 = vadd.f32 %v235, %v244
    %v252 = vadd.f32 %v239, %v244
    %vm253 = vcmp.gt.f32.partialorder %v245, 0.0
    %vm254 = vcmp.gt.f32.partialorder %v246, 0.0
    %vm255 = vcmp.gt.f32.partialorder %v247, 0.0
    %vm256 = vcmp.gt.f32.partialorder %v248, 0.0
    %vm257 = vcmp.gt.f32.partialorder %v249, 0.0
    %vm258 = vcmp.gt.f32.partialorder %v250, 0.0
    %vm259 = vcmp.gt.f32.partialorder %v251, 0.0
    %vm260 = vcmp.gt.f32.partialorder %v252, 0.0
    %v261 = vmul.f32 %v245, 0.2
    %v262 = vmul.f32 %v246, 0.2
    %v263 = vmul.f32 %v247, 0.2
    %v264 = vmul.f32 %v248, 0.2
    %v265 = vmul.f32 %v249, 0.2
    %v266 = vmul.f32 %v250, 0.2
    %v267 = vmul.f32 %v251, 0.2
    %v268 = vmul.f32 %v252, 0.2
    %v269 = vsel %vm253, %v245, %v261
    %v270 = vsel %vm254, %v246, %v262
    %v271 = vsel %vm255, %v247, %v263
    %v272 = vsel %vm256, %v248, %v264
    %v273 = vsel %vm257, %v249, %v265
    %v274 = vsel %vm258, %v250, %v266
    %v275 = vsel %vm259, %v251, %v267
    %v276 = vsel %vm260, %v252, %v268
    %v277 = vsub.f32 0.0, %v269
    %v278 = vsub.f32 0.0, %v270
    %v279 = vsub.f32 0.0, %v271
    %v280 = vsub.f32 0.0, %v272
    %v281 = vsub.f32 0.0, %v273
    %v282 = vsub.f32 0.0, %v274
    %v283 = vsub.f32 0.0, %v275
    %v284 = vsub.f32 0.0, %v276
    %v285 = vmul.f32 %v277, 1.442695
    %v286 = vpow.pop %v285
    %v287 = vmul.f32 %v278, 1.442695
    %v288 = vpow.pop %v287
    %v289 = vmul.f32 %v279, 1.442695
    %v290 = vpow.pop %v289
    %v291 = vmul.f32 %v280, 1.442695
    %v292 = vpow.pop %v291
    %v293 = vmul.f32 %v281, 1.442695
    %v294 = vpow.pop %v293
    %v295 = vmul.f32 %v282, 1.442695
    %v296 = vpow.pop %v295
    %v297 = vmul.f32 %v283, 1.442695
    %v298 = vpow.pop %v297
    %v299 = vmul.f32 %v284, 1.442695
    %v300 = vpow.pop %v299
    %v301 = vsel %vm41, %v286, 0.0
    %v302 = vsel %vm42, %v288, 0.0
    %v303 = vsel %vm43, %v290, 0.0
    %v304 = vsel %vm44, %v292, 0.0
    %v305 = vsel %vm45, %v294, 0.0
    %v306 = vsel %vm46, %v296, 0.0
    %v307 = vsel %vm47, %v298, 0.0
    %v308 = vsel %vm48, %v300, 0.0
    %vm309 = vcmask 523264
    %v310 = vsel %vm309, %v301, 0.0
    %311 = vadd.xlane.f32.xlu0 %v310
    %v312 = vpop.xlane.xlu0 %311
    %v313 = vsel %vm309, %v302, 0.0
    %314 = vadd.xlane.f32.xlu0 %v313
    %v315 = vpop.xlane.xlu0 %314
    %v316 = vsel %vm309, %v303, 0.0
    %317 = vadd.xlane.f32.xlu0 %v316
    %v318 = vpop.xlane.xlu0 %317
    %v319 = vsel %vm309, %v304, 0.0
    %320 = vadd.xlane.f32.xlu0 %v319
    %v321 = vpop.xlane.xlu0 %320
    %v322 = vsel %vm309, %v305, 0.0
    %323 = vadd.xlane.f32.xlu0 %v322
    %v324 = vpop.xlane.xlu0 %323
    %v325 = vsel %vm309, %v306, 0.0
    %326 = vadd.xlane.f32.xlu0 %v325
    %v327 = vpop.xlane.xlu0 %326
    %v328 = vsel %vm309, %v307, 0.0
    %329 = vadd.xlane.f32.xlu0 %v328
    %v330 = vpop.xlane.xlu0 %329
    %v331 = vsel %vm309, %v308, 0.0
    %332 = vadd.xlane.f32.xlu0 %v331
    %v333 = vpop.xlane.xlu0 %332
    %v334 = vrcp.pop %v312
    %v335 = vrcp.pop %v315
    %v336 = vrcp.pop %v318
    %v337 = vrcp.pop %v321
    %v338 = vrcp.pop %v324
    %v339 = vrcp.pop %v327
    %v340 = vrcp.pop %v330
    %v341 = vrcp.pop %v333
    %v342 = vmul.f32 %v301, %v334
    %v343 = vmul.f32 %v302, %v335
    %v344 = vmul.f32 %v303, %v336
    %v345 = vmul.f32 %v304, %v337
    %v346 = vmul.f32 %v305, %v338
    %v347 = vmul.f32 %v306, %v339
    %v348 = vmul.f32 %v307, %v340
    %v349 = vmul.f32 %v308, %v341
    %vm350 = vcmp.ge.s32.totalorder %v208, 0
    %vm351 = vcmp.lt.s32.totalorder %v208, 16
    %vm352 = vmand %vm350, %vm351
    %v353 = vsel %vm352, %v113, 0.0
    %v354 = vsel %vm352, %v116, 0.0
    %v355 = vsel %vm352, %v121, 0.0
    %v356 = vsel %vm352, %v124, 0.0
    %v357 = vsel %vm352, %v129, 0.0
    %v358 = vsel %vm352, %v132, 0.0
    %v359 = vsel %vm352, %v137, 0.0
    %v360 = vsel %vm352, %v140, 0.0
    %361 = vset.pattern.permute.xlu0 65
    %362 = vperm.xlu0 %361, %v113
    %v363 = vpop.permute.xlu0 %362
    %365 = vset.pattern.permute.xlu0 65
    %366 = vperm.xlu0 %365, %v116
    %v367 = vpop.permute.xlu0 %366
    %369 = vset.pattern.permute.xlu0 65
    %370 = vperm.xlu0 %369, %v121
    %v371 = vpop.permute.xlu0 %370
    %373 = vset.pattern.permute.xlu0 65
    %374 = vperm.xlu0 %373, %v124
    %v375 = vpop.permute.xlu0 %374
    %377 = vset.pattern.permute.xlu0 65
    %378 = vperm.xlu0 %377, %v129
    %v379 = vpop.permute.xlu0 %378
    %381 = vset.pattern.permute.xlu0 65
    %382 = vperm.xlu0 %381, %v132
    %v383 = vpop.permute.xlu0 %382
    %385 = vset.pattern.permute.xlu0 65
    %386 = vperm.xlu0 %385, %v137
    %v387 = vpop.permute.xlu0 %386
    %389 = vset.pattern.permute.xlu0 65
    %390 = vperm.xlu0 %389, %v140
    %v391 = vpop.permute.xlu0 %390
    %v393 = vlaneseq
    %v394 = vshrl.u32 %v393, 7
    %v395 = vsub.s32 5, %v394
    %v396 = vrot.slane %v191, %v395
    %v397 = vadd.f32 %v363, %v396
    %v398 = vadd.f32 %v367, %v396
    %v399 = vadd.f32 %v371, %v396
    %v400 = vadd.f32 %v375, %v396
    %v401 = vadd.f32 %v379, %v396
    %v402 = vadd.f32 %v383, %v396
    %v403 = vadd.f32 %v387, %v396
    %v404 = vadd.f32 %v391, %v396
    %vm405 = vcmp.gt.f32.partialorder %v397, 0.0
    %vm406 = vcmp.gt.f32.partialorder %v398, 0.0
    %vm407 = vcmp.gt.f32.partialorder %v399, 0.0
    %vm408 = vcmp.gt.f32.partialorder %v400, 0.0
    %vm409 = vcmp.gt.f32.partialorder %v401, 0.0
    %vm410 = vcmp.gt.f32.partialorder %v402, 0.0
    %vm411 = vcmp.gt.f32.partialorder %v403, 0.0
    %vm412 = vcmp.gt.f32.partialorder %v404, 0.0
    %v413 = vmul.f32 %v397, 0.2
    %v414 = vmul.f32 %v398, 0.2
    %v415 = vmul.f32 %v399, 0.2
    %v416 = vmul.f32 %v400, 0.2
    %v417 = vmul.f32 %v401, 0.2
    %v418 = vmul.f32 %v402, 0.2
    %v419 = vmul.f32 %v403, 0.2
    %v420 = vmul.f32 %v404, 0.2
    %v421 = vsel %vm405, %v397, %v413
    %v422 = vsel %vm406, %v398, %v414
    %v423 = vsel %vm407, %v399, %v415
    %v424 = vsel %vm408, %v400, %v416
    %v425 = vsel %vm409, %v401, %v417
    %v426 = vsel %vm410, %v402, %v418
    %v427 = vsel %vm411, %v403, %v419
    %v428 = vsel %vm412, %v404, %v420
    %v429 = vsub.f32 0.0, %v421
    %v430 = vsub.f32 0.0, %v422
    %v431 = vsub.f32 0.0, %v423
    %v432 = vsub.f32 0.0, %v424
    %v433 = vsub.f32 0.0, %v425
    %v434 = vsub.f32 0.0, %v426
    %v435 = vsub.f32 0.0, %v427
    %v436 = vsub.f32 0.0, %v428
    %v437 = vmul.f32 %v429, 1.442695
    %v438 = vpow.pop %v437
    %v439 = vmul.f32 %v430, 1.442695
    %v440 = vpow.pop %v439
    %v441 = vmul.f32 %v431, 1.442695
    %v442 = vpow.pop %v441
    %v443 = vmul.f32 %v432, 1.442695
    %v444 = vpow.pop %v443
    %v445 = vmul.f32 %v433, 1.442695
    %v446 = vpow.pop %v445
    %v447 = vmul.f32 %v434, 1.442695
    %v448 = vpow.pop %v447
    %v449 = vmul.f32 %v435, 1.442695
    %v450 = vpow.pop %v449
    %v451 = vmul.f32 %v436, 1.442695
    %v452 = vpow.pop %v451
    %v453 = vsel %vm41, %v438, 0.0
    %v454 = vsel %vm42, %v440, 0.0
    %v455 = vsel %vm43, %v442, 0.0
    %v456 = vsel %vm44, %v444, 0.0
    %v457 = vsel %vm45, %v446, 0.0
    %v458 = vsel %vm46, %v448, 0.0
    %v459 = vsel %vm47, %v450, 0.0
    %v460 = vsel %vm48, %v452, 0.0
    %v461 = vsel %vm309, %v453, 0.0
    %462 = vadd.xlane.f32.xlu0 %v461
    %v463 = vpop.xlane.xlu0 %462
    %v464 = vsel %vm309, %v454, 0.0
    %465 = vadd.xlane.f32.xlu0 %v464
    %v466 = vpop.xlane.xlu0 %465
    %v467 = vsel %vm309, %v455, 0.0
    %468 = vadd.xlane.f32.xlu0 %v467
    %v469 = vpop.xlane.xlu0 %468
    %v470 = vsel %vm309, %v456, 0.0
    %471 = vadd.xlane.f32.xlu0 %v470
    %v472 = vpop.xlane.xlu0 %471
    %v473 = vsel %vm309, %v457, 0.0
    %474 = vadd.xlane.f32.xlu0 %v473
    %v475 = vpop.xlane.xlu0 %474
    %v476 = vsel %vm309, %v458, 0.0
    %477 = vadd.xlane.f32.xlu0 %v476
    %v478 = vpop.xlane.xlu0 %477
    %v479 = vsel %vm309, %v459, 0.0
    %480 = vadd.xlane.f32.xlu0 %v479
    %v481 = vpop.xlane.xlu0 %480
    %v482 = vsel %vm309, %v460, 0.0
    %483 = vadd.xlane.f32.xlu0 %v482
    %v484 = vpop.xlane.xlu0 %483
    %v485 = vrcp.pop %v463
    %v486 = vrcp.pop %v466
    %v487 = vrcp.pop %v469
    %v488 = vrcp.pop %v472
    %v489 = vrcp.pop %v475
    %v490 = vrcp.pop %v478
    %v491 = vrcp.pop %v481
    %v492 = vrcp.pop %v484
    %v493 = vmul.f32 %v453, %v485
    %v494 = vmul.f32 %v454, %v486
    %v495 = vmul.f32 %v455, %v487
    %v496 = vmul.f32 %v456, %v488
    %v497 = vmul.f32 %v457, %v489
    %v498 = vmul.f32 %v458, %v490
    %v499 = vmul.f32 %v459, %v491
    %v500 = vmul.f32 %v460, %v492
    %vm501 = vcmp.ge.s32.totalorder %v208, 16
    %vm502 = vcmp.lt.s32.totalorder %v208, 32
    %vm503 = vmand %vm501, %vm502
    %v504 = vsel %vm503, %v113, 0.0
    %v505 = vsel %vm503, %v116, 0.0
    %v506 = vsel %vm503, %v121, 0.0
    %v507 = vsel %vm503, %v124, 0.0
    %v508 = vsel %vm503, %v129, 0.0
    %v509 = vsel %vm503, %v132, 0.0
    %v510 = vsel %vm503, %v137, 0.0
    %v511 = vsel %vm503, %v140, 0.0
    %512 = vset.pattern.permute.xlu0 66
    %513 = vperm.xlu0 %512, %v113
    %v514 = vpop.permute.xlu0 %513
    %516 = vset.pattern.permute.xlu0 66
    %517 = vperm.xlu0 %516, %v116
    %v518 = vpop.permute.xlu0 %517
    %520 = vset.pattern.permute.xlu0 66
    %521 = vperm.xlu0 %520, %v121
    %v522 = vpop.permute.xlu0 %521
    %524 = vset.pattern.permute.xlu0 66
    %525 = vperm.xlu0 %524, %v124
    %v526 = vpop.permute.xlu0 %525
    %528 = vset.pattern.permute.xlu0 66
    %529 = vperm.xlu0 %528, %v129
    %v530 = vpop.permute.xlu0 %529
    %532 = vset.pattern.permute.xlu0 66
    %533 = vperm.xlu0 %532, %v132
    %v534 = vpop.permute.xlu0 %533
    %536 = vset.pattern.permute.xlu0 66
    %537 = vperm.xlu0 %536, %v137
    %v538 = vpop.permute.xlu0 %537
    %540 = vset.pattern.permute.xlu0 66
    %541 = vperm.xlu0 %540, %v140
    %v542 = vpop.permute.xlu0 %541
    %v544 = vlaneseq
    %v545 = vshrl.u32 %v544, 7
    %v546 = vsub.s32 6, %v545
    %v547 = vrot.slane %v191, %v546
    %v548 = vadd.f32 %v514, %v547
    %v549 = vadd.f32 %v518, %v547
    %v550 = vadd.f32 %v522, %v547
    %v551 = vadd.f32 %v526, %v547
    %v552 = vadd.f32 %v530, %v547
    %v553 = vadd.f32 %v534, %v547
    %v554 = vadd.f32 %v538, %v547
    %v555 = vadd.f32 %v542, %v547
    %vm556 = vcmp.gt.f32.partialorder %v548, 0.0
    %vm557 = vcmp.gt.f32.partialorder %v549, 0.0
    %vm558 = vcmp.gt.f32.partialorder %v550, 0.0
    %vm559 = vcmp.gt.f32.partialorder %v551, 0.0
    %vm560 = vcmp.gt.f32.partialorder %v552, 0.0
    %vm561 = vcmp.gt.f32.partialorder %v553, 0.0
    %vm562 = vcmp.gt.f32.partialorder %v554, 0.0
    %vm563 = vcmp.gt.f32.partialorder %v555, 0.0
    %v564 = vmul.f32 %v548, 0.2
    %v565 = vmul.f32 %v549, 0.2
    %v566 = vmul.f32 %v550, 0.2
    %v567 = vmul.f32 %v551, 0.2
    %v568 = vmul.f32 %v552, 0.2
    %v569 = vmul.f32 %v553, 0.2
    %v570 = vmul.f32 %v554, 0.2
    %v571 = vmul.f32 %v555, 0.2
    %v572 = vsel %vm556, %v548, %v564
    %v573 = vsel %vm557, %v549, %v565
    %v574 = vsel %vm558, %v550, %v566
    %v575 = vsel %vm559, %v551, %v567
    %v576 = vsel %vm560, %v552, %v568
    %v577 = vsel %vm561, %v553, %v569
    %v578 = vsel %vm562, %v554, %v570
    %v579 = vsel %vm563, %v555, %v571
    %v580 = vsub.f32 0.0, %v572
    %v581 = vsub.f32 0.0, %v573
    %v582 = vsub.f32 0.0, %v574
    %v583 = vsub.f32 0.0, %v575
    %v584 = vsub.f32 0.0, %v576
    %v585 = vsub.f32 0.0, %v577
    %v586 = vsub.f32 0.0, %v578
    %v587 = vsub.f32 0.0, %v579
    %v588 = vmul.f32 %v580, 1.442695
    %v589 = vpow.pop %v588
    %v590 = vmul.f32 %v581, 1.442695
    %v591 = vpow.pop %v590
    %v592 = vmul.f32 %v582, 1.442695
    %v593 = vpow.pop %v592
    %v594 = vmul.f32 %v583, 1.442695
    %v595 = vpow.pop %v594
    %v596 = vmul.f32 %v584, 1.442695
    %v597 = vpow.pop %v596
    %v598 = vmul.f32 %v585, 1.442695
    %v599 = vpow.pop %v598
    %v600 = vmul.f32 %v586, 1.442695
    %v601 = vpow.pop %v600
    %v602 = vmul.f32 %v587, 1.442695
    %v603 = vpow.pop %v602
    %v604 = vsel %vm41, %v589, 0.0
    %v605 = vsel %vm42, %v591, 0.0
    %v606 = vsel %vm43, %v593, 0.0
    %v607 = vsel %vm44, %v595, 0.0
    %v608 = vsel %vm45, %v597, 0.0
    %v609 = vsel %vm46, %v599, 0.0
    %v610 = vsel %vm47, %v601, 0.0
    %v611 = vsel %vm48, %v603, 0.0
    %v612 = vsel %vm309, %v604, 0.0
    %613 = vadd.xlane.f32.xlu0 %v612
    %v614 = vpop.xlane.xlu0 %613
    %v615 = vsel %vm309, %v605, 0.0
    %616 = vadd.xlane.f32.xlu0 %v615
    %v617 = vpop.xlane.xlu0 %616
    %v618 = vsel %vm309, %v606, 0.0
    %619 = vadd.xlane.f32.xlu0 %v618
    %v620 = vpop.xlane.xlu0 %619
    %v621 = vsel %vm309, %v607, 0.0
    %622 = vadd.xlane.f32.xlu0 %v621
    %v623 = vpop.xlane.xlu0 %622
    %v624 = vsel %vm309, %v608, 0.0
    %625 = vadd.xlane.f32.xlu0 %v624
    %v626 = vpop.xlane.xlu0 %625
    %v627 = vsel %vm309, %v609, 0.0
    %628 = vadd.xlane.f32.xlu0 %v627
    %v629 = vpop.xlane.xlu0 %628
    %v630 = vsel %vm309, %v610, 0.0
    %631 = vadd.xlane.f32.xlu0 %v630
    %v632 = vpop.xlane.xlu0 %631
    %v633 = vsel %vm309, %v611, 0.0
    %634 = vadd.xlane.f32.xlu0 %v633
    %v635 = vpop.xlane.xlu0 %634
    %v636 = vrcp.pop %v614
    %v637 = vrcp.pop %v617
    %v638 = vrcp.pop %v620
    %v639 = vrcp.pop %v623
    %v640 = vrcp.pop %v626
    %v641 = vrcp.pop %v629
    %v642 = vrcp.pop %v632
    %v643 = vrcp.pop %v635
    %v644 = vmul.f32 %v604, %v636
    %v645 = vmul.f32 %v605, %v637
    %v646 = vmul.f32 %v606, %v638
    %v647 = vmul.f32 %v607, %v639
    %v648 = vmul.f32 %v608, %v640
    %v649 = vmul.f32 %v609, %v641
    %v650 = vmul.f32 %v610, %v642
    %v651 = vmul.f32 %v611, %v643
    %vm652 = vcmp.ge.s32.totalorder %v208, 32
    %vm653 = vcmp.lt.s32.totalorder %v208, 48
    %vm654 = vmand %vm652, %vm653
    %v655 = vsel %vm654, %v113, 0.0
    %v656 = vsel %vm654, %v116, 0.0
    %v657 = vsel %vm654, %v121, 0.0
    %v658 = vsel %vm654, %v124, 0.0
    %v659 = vsel %vm654, %v129, 0.0
    %v660 = vsel %vm654, %v132, 0.0
    %v661 = vsel %vm654, %v137, 0.0
    %v662 = vsel %vm654, %v140, 0.0
    %663 = vset.pattern.permute.xlu0 67
    %664 = vperm.xlu0 %663, %v113
    %v665 = vpop.permute.xlu0 %664
    %667 = vset.pattern.permute.xlu0 67
    %668 = vperm.xlu0 %667, %v116
    %v669 = vpop.permute.xlu0 %668
    %671 = vset.pattern.permute.xlu0 67
    %672 = vperm.xlu0 %671, %v121
    %v673 = vpop.permute.xlu0 %672
    %675 = vset.pattern.permute.xlu0 67
    %676 = vperm.xlu0 %675, %v124
    %v677 = vpop.permute.xlu0 %676
    %679 = vset.pattern.permute.xlu0 67
    %680 = vperm.xlu0 %679, %v129
    %v681 = vpop.permute.xlu0 %680
    %683 = vset.pattern.permute.xlu0 67
    %684 = vperm.xlu0 %683, %v132
    %v685 = vpop.permute.xlu0 %684
    %687 = vset.pattern.permute.xlu0 67
    %688 = vperm.xlu0 %687, %v137
    %v689 = vpop.permute.xlu0 %688
    %691 = vset.pattern.permute.xlu0 67
    %692 = vperm.xlu0 %691, %v140
    %v693 = vpop.permute.xlu0 %692
    %v695 = vlaneseq
    %v696 = vshrl.u32 %v695, 7
    %v697 = vsub.s32 7, %v696
    %v698 = vrot.slane %v191, %v697
    %v699 = vadd.f32 %v665, %v698
    %v700 = vadd.f32 %v669, %v698
    %v701 = vadd.f32 %v673, %v698
    %v702 = vadd.f32 %v677, %v698
    %v703 = vadd.f32 %v681, %v698
    %v704 = vadd.f32 %v685, %v698
    %v705 = vadd.f32 %v689, %v698
    %v706 = vadd.f32 %v693, %v698
    %vm707 = vcmp.gt.f32.partialorder %v699, 0.0
    %vm708 = vcmp.gt.f32.partialorder %v700, 0.0
    %vm709 = vcmp.gt.f32.partialorder %v701, 0.0
    %vm710 = vcmp.gt.f32.partialorder %v702, 0.0
    %vm711 = vcmp.gt.f32.partialorder %v703, 0.0
    %vm712 = vcmp.gt.f32.partialorder %v704, 0.0
    %vm713 = vcmp.gt.f32.partialorder %v705, 0.0
    %vm714 = vcmp.gt.f32.partialorder %v706, 0.0
    %v715 = vmul.f32 %v699, 0.2
    %v716 = vmul.f32 %v700, 0.2
    %v717 = vmul.f32 %v701, 0.2
    %v718 = vmul.f32 %v702, 0.2
    %v719 = vmul.f32 %v703, 0.2
    %v720 = vmul.f32 %v704, 0.2
    %v721 = vmul.f32 %v705, 0.2
    %v722 = vmul.f32 %v706, 0.2
    %v723 = vsel %vm707, %v699, %v715
    %v724 = vsel %vm708, %v700, %v716
    %v725 = vsel %vm709, %v701, %v717
    %v726 = vsel %vm710, %v702, %v718
    %v727 = vsel %vm711, %v703, %v719
    %v728 = vsel %vm712, %v704, %v720
    %v729 = vsel %vm713, %v705, %v721
    %v730 = vsel %vm714, %v706, %v722
    %v731 = vsub.f32 0.0, %v723
    %v732 = vsub.f32 0.0, %v724
    %v733 = vsub.f32 0.0, %v725
    %v734 = vsub.f32 0.0, %v726
    %v735 = vsub.f32 0.0, %v727
    %v736 = vsub.f32 0.0, %v728
    %v737 = vsub.f32 0.0, %v729
    %v738 = vsub.f32 0.0, %v730
    %v739 = vmul.f32 %v731, 1.442695
    %v740 = vpow.pop %v739
    %v741 = vmul.f32 %v732, 1.442695
    %v742 = vpow.pop %v741
    %v743 = vmul.f32 %v733, 1.442695
    %v744 = vpow.pop %v743
    %v745 = vmul.f32 %v734, 1.442695
    %v746 = vpow.pop %v745
    %v747 = vmul.f32 %v735, 1.442695
    %v748 = vpow.pop %v747
    %v749 = vmul.f32 %v736, 1.442695
    %v750 = vpow.pop %v749
    %v751 = vmul.f32 %v737, 1.442695
    %v752 = vpow.pop %v751
    %v753 = vmul.f32 %v738, 1.442695
    %v754 = vpow.pop %v753
    %v755 = vsel %vm41, %v740, 0.0
    %v756 = vsel %vm42, %v742, 0.0
    %v757 = vsel %vm43, %v744, 0.0
    %v758 = vsel %vm44, %v746, 0.0
    %v759 = vsel %vm45, %v748, 0.0
    %v760 = vsel %vm46, %v750, 0.0
    %v761 = vsel %vm47, %v752, 0.0
    %v762 = vsel %vm48, %v754, 0.0
    %v763 = vsel %vm309, %v755, 0.0
    %764 = vadd.xlane.f32.xlu0 %v763
    %v765 = vpop.xlane.xlu0 %764
    %v766 = vsel %vm309, %v756, 0.0
    %767 = vadd.xlane.f32.xlu0 %v766
    %v768 = vpop.xlane.xlu0 %767
    %v769 = vsel %vm309, %v757, 0.0
    %770 = vadd.xlane.f32.xlu0 %v769
    %v771 = vpop.xlane.xlu0 %770
    %v772 = vsel %vm309, %v758, 0.0
    %773 = vadd.xlane.f32.xlu0 %v772
    %v774 = vpop.xlane.xlu0 %773
    %v775 = vsel %vm309, %v759, 0.0
    %776 = vadd.xlane.f32.xlu0 %v775
    %v777 = vpop.xlane.xlu0 %776
    %v778 = vsel %vm309, %v760, 0.0
    %779 = vadd.xlane.f32.xlu0 %v778
    %v780 = vpop.xlane.xlu0 %779
    %v781 = vsel %vm309, %v761, 0.0
    %782 = vadd.xlane.f32.xlu0 %v781
    %v783 = vpop.xlane.xlu0 %782
    %v784 = vsel %vm309, %v762, 0.0
    %785 = vadd.xlane.f32.xlu0 %v784
    %v786 = vpop.xlane.xlu0 %785
    %v787 = vrcp.pop %v765
    %v788 = vrcp.pop %v768
    %v789 = vrcp.pop %v771
    %v790 = vrcp.pop %v774
    %v791 = vrcp.pop %v777
    %v792 = vrcp.pop %v780
    %v793 = vrcp.pop %v783
    %v794 = vrcp.pop %v786
    %v795 = vmul.f32 %v755, %v787
    %v796 = vmul.f32 %v756, %v788
    %v797 = vmul.f32 %v757, %v789
    %v798 = vmul.f32 %v758, %v790
    %v799 = vmul.f32 %v759, %v791
    %v800 = vmul.f32 %v760, %v792
    %v801 = vmul.f32 %v761, %v793
    %v802 = vmul.f32 %v762, %v794
    %vm803 = vcmp.ge.s32.totalorder %v208, 48
    %vm804 = vcmp.lt.s32.totalorder %v208, 64
    %vm805 = vmand %vm803, %vm804
    %v806 = vsel %vm805, %v113, 0.0
    %v807 = vsel %vm805, %v116, 0.0
    %v808 = vsel %vm805, %v121, 0.0
    %v809 = vsel %vm805, %v124, 0.0
    %v810 = vsel %vm805, %v129, 0.0
    %v811 = vsel %vm805, %v132, 0.0
    %v812 = vsel %vm805, %v137, 0.0
    %v813 = vsel %vm805, %v140, 0.0
    %822 = vrot.lane.b32.xlu0 %v493, 64
    %v823 = vpop.permute.xlu0 %822
    %824 = vrot.lane.b32.xlu0 %v494, 64
    %v825 = vpop.permute.xlu0 %824
    %826 = vrot.lane.b32.xlu0 %v495, 64
    %v827 = vpop.permute.xlu0 %826
    %828 = vrot.lane.b32.xlu0 %v496, 64
    %v829 = vpop.permute.xlu0 %828
    %830 = vrot.lane.b32.xlu0 %v497, 64
    %v831 = vpop.permute.xlu0 %830
    %832 = vrot.lane.b32.xlu0 %v498, 64
    %v833 = vpop.permute.xlu0 %832
    %834 = vrot.lane.b32.xlu0 %v499, 64
    %v835 = vpop.permute.xlu0 %834
    %836 = vrot.lane.b32.xlu0 %v500, 64
    %v837 = vpop.permute.xlu0 %836
    %854 = vrot.lane.b32.xlu0 %v795, 64
    %v855 = vpop.permute.xlu0 %854
    %856 = vrot.lane.b32.xlu0 %v796, 64
    %v857 = vpop.permute.xlu0 %856
    %858 = vrot.lane.b32.xlu0 %v797, 64
    %v859 = vpop.permute.xlu0 %858
    %860 = vrot.lane.b32.xlu0 %v798, 64
    %v861 = vpop.permute.xlu0 %860
    %862 = vrot.lane.b32.xlu0 %v799, 64
    %v863 = vpop.permute.xlu0 %862
    %864 = vrot.lane.b32.xlu0 %v800, 64
    %v865 = vpop.permute.xlu0 %864
    %866 = vrot.lane.b32.xlu0 %v801, 64
    %v867 = vpop.permute.xlu0 %866
    %868 = vrot.lane.b32.xlu0 %v802, 64
    %v869 = vpop.permute.xlu0 %868
    %v878 = vsel %vm309, %v342, %v823
    %v879 = vsel %vm309, %v343, %v825
    %v880 = vsel %vm309, %v344, %v827
    %v881 = vsel %vm309, %v345, %v829
    %v882 = vsel %vm309, %v346, %v831
    %v883 = vsel %vm309, %v347, %v833
    %v884 = vsel %vm309, %v348, %v835
    %v885 = vsel %vm309, %v349, %v837
    %v886 = vsel %vm309, %v644, %v855
    %v887 = vsel %vm309, %v645, %v857
    %v888 = vsel %vm309, %v646, %v859
    %v889 = vsel %vm309, %v647, %v861
    %v890 = vsel %vm309, %v648, %v863
    %v891 = vsel %vm309, %v649, %v865
    %v892 = vsel %vm309, %v650, %v867
    %v893 = vsel %vm309, %v651, %v869
    %v894 = vpack.c.bf16 %v879, %v878
    %v895 = vpack.c.bf16 %v887, %v886
    %v896 = vpack.c.bf16 %v881, %v880
    %v897 = vpack.c.bf16 %v889, %v888
    %v898 = vpack.c.bf16 %v883, %v882
    %v899 = vpack.c.bf16 %v891, %v890
    %v900 = vpack.c.bf16 %v885, %v884
    %v901 = vpack.c.bf16 %v893, %v892
    %v902 = vpack.c.bf16 %v354, %v353
    %v903 = vpack.c.bf16 %v356, %v355
    %v904 = vpack.c.bf16 %v358, %v357
    %v905 = vpack.c.bf16 %v360, %v359
    %v906 = vpack.c.bf16 %v505, %v504
    %v907 = vpack.c.bf16 %v507, %v506
    %v908 = vpack.c.bf16 %v509, %v508
    %v909 = vpack.c.bf16 %v511, %v510
    %v910 = vpack.c.bf16 %v656, %v655
    %v911 = vpack.c.bf16 %v658, %v657
    %v912 = vpack.c.bf16 %v660, %v659
    %v913 = vpack.c.bf16 %v662, %v661
    %v914 = vpack.c.bf16 %v807, %v806
    %v915 = vpack.c.bf16 %v809, %v808
    %v916 = vpack.c.bf16 %v811, %v810
    %v917 = vpack.c.bf16 %v813, %v812
    %918 = vmatprep.subr.bf16.mxu0 0
    %919 = vmatpush1.bf16.msra.mxu0 %v909
    %920 = vmatprep.subr.bf16.mxu0 0
    %921 = vmatpush1.bf16.msra.mxu0 %v908
    %922 = vmatprep.subr.bf16.mxu0 0
    %923 = vmatpush1.bf16.msra.mxu0 %v907
    %924 = vmatprep.subr.bf16.mxu0 0
    %925 = vmatpush1.bf16.msra.mxu0 %v906
    %926 = vmatprep.subr.bf16.mxu0 0
    %927 = vmatpush1.bf16.msra.mxu0 %v905
    %928 = vmatprep.subr.bf16.mxu0 0
    %929 = vmatpush1.bf16.msra.mxu0 %v904
    %930 = vmatprep.subr.bf16.mxu0 0
    %931 = vmatpush1.bf16.msra.mxu0 %v903
    %932 = vmatprep.subr.bf16.mxu0 0
    %933 = vmatpush1.bf16.msra.mxu0 %v902
    %934 = vmatprep.subr.bf16.mxu0 0
    %935 = vmatpush2.bf16.msra.mxu0 %v917
    %936 = vmatprep.subr.bf16.mxu0 0
    %937 = vmatpush2.bf16.msra.mxu0 %v916
    %938 = vmatprep.subr.bf16.mxu0 0
    %939 = vmatpush2.bf16.msra.mxu0 %v915
    %940 = vmatprep.subr.bf16.mxu0 0
    %941 = vmatpush2.bf16.msra.mxu0 %v914
    %942 = vmatprep.subr.bf16.mxu0 0
    %943 = vmatpush2.bf16.msra.mxu0 %v913
    %944 = vmatprep.subr.bf16.mxu0 0
    %945 = vmatpush2.bf16.msra.mxu0 %v912
    %946 = vmatprep.subr.bf16.mxu0 0
    %947 = vmatpush2.bf16.msra.mxu0 %v911
    %948 = vmatprep.subr.bf16.mxu0 0
    %949 = vmatpush2.bf16.msra.mxu0 %v910
    %950 = vmatprep.mubr.bf16.mxu0 %v895
    %951 = vmatmul.mubr.bf16.gmra.mxu0 %v894
    %v952 = vpop.f32.mrf.mxu0
    %v953 = vadd.f32 0.0, %v952
    %v954 = vpop.f32.mrf.mxu0
    %v955 = vpop.f32.mrf.mxu0
    %v956 = vadd.f32 0.0, %v955
    %v957 = vpop.f32.mrf.mxu0
    %958 = vmatprep.mubr.bf16.mxu0 %v897
    %959 = vmatmul.mubr.bf16.gmra.mxu0 %v896
    %v960 = vpop.f32.mrf.mxu0
    %v961 = vadd.f32 0.0, %v960
    %v962 = vpop.f32.mrf.mxu0
    %v963 = vpop.f32.mrf.mxu0
    %v964 = vadd.f32 0.0, %v963
    %v965 = vpop.f32.mrf.mxu0
    %966 = vmatprep.mubr.bf16.mxu0 %v899
    %967 = vmatmul.mubr.bf16.gmra.mxu0 %v898
    %v968 = vpop.f32.mrf.mxu0
    %v969 = vadd.f32 0.0, %v968
    %v970 = vpop.f32.mrf.mxu0
    %v971 = vpop.f32.mrf.mxu0
    %v972 = vadd.f32 0.0, %v971
    %v973 = vpop.f32.mrf.mxu0
    %974 = vmatprep.mubr.bf16.mxu0 %v901
    %975 = vmatmul.mubr.bf16.gmra.mxu0 %v900
    %v976 = vpop.f32.mrf.mxu0
    %v977 = vadd.f32 0.0, %v976
    %v978 = vpop.f32.mrf.mxu0
    %v979 = vpop.f32.mrf.mxu0
    %v980 = vadd.f32 0.0, %v979
    %v981 = vpop.f32.mrf.mxu0
    %982 = vdwg.mxu0
    %vm983 = vcmp.gt.f32.partialorder %v953, 0.0
    %vm984 = vcmp.gt.f32.partialorder %v956, 0.0
    %vm985 = vcmp.gt.f32.partialorder %v961, 0.0
    %vm986 = vcmp.gt.f32.partialorder %v964, 0.0
    %vm987 = vcmp.gt.f32.partialorder %v969, 0.0
    %vm988 = vcmp.gt.f32.partialorder %v972, 0.0
    %vm989 = vcmp.gt.f32.partialorder %v977, 0.0
    %vm990 = vcmp.gt.f32.partialorder %v980, 0.0
    %v991 = vmul.f32 %v953, 1.442695
    %v992 = vpow.pop %v991
    %v993 = vmul.f32 %v956, 1.442695
    %v994 = vpow.pop %v993
    %v995 = vmul.f32 %v961, 1.442695
    %v996 = vpow.pop %v995
    %v997 = vmul.f32 %v964, 1.442695
    %v998 = vpow.pop %v997
    %v999 = vmul.f32 %v969, 1.442695
    %v1000 = vpow.pop %v999
    %v1001 = vmul.f32 %v972, 1.442695
    %v1002 = vpow.pop %v1001
    %v1003 = vmul.f32 %v977, 1.442695
    %v1004 = vpow.pop %v1003
    %v1005 = vmul.f32 %v980, 1.442695
    %v1006 = vpow.pop %v1005
    %v1007 = vsub.f32 %v992, 1.0
    %v1008 = vsub.f32 %v994, 1.0
    %v1009 = vsub.f32 %v996, 1.0
    %v1010 = vsub.f32 %v998, 1.0
    %v1011 = vsub.f32 %v1000, 1.0
    %v1012 = vsub.f32 %v1002, 1.0
    %v1013 = vsub.f32 %v1004, 1.0
    %v1014 = vsub.f32 %v1006, 1.0
    %v1015 = vsel %vm983, %v953, %v1007
    %v1016 = vsel %vm984, %v956, %v1008
    %v1017 = vsel %vm985, %v961, %v1009
    %v1018 = vsel %vm986, %v964, %v1010
    %v1019 = vsel %vm987, %v969, %v1011
    %v1020 = vsel %vm988, %v972, %v1012
    %v1021 = vsel %vm989, %v977, %v1013
    %v1022 = vsel %vm990, %v980, %v1014
    %v1023 = vpack.c.bf16 %v1016, %v1015
    %v1024 = vpack.c.bf16 %v1018, %v1017
    %v1025 = vpack.c.bf16 %v1020, %v1019
    %v1026 = vpack.c.bf16 %v1022, %v1021
    %v1027 = vld [vmem:[%s3] sm:$0xf]
    %v1028 = vld [vmem:[%s3 + $0x4] sm:$0xf]
    %v1029 = vld [vmem:[%s3 + $0x8] sm:$0xf]
    %v1030 = vld [vmem:[%s3 + $0xc] sm:$0xf]
    %v1031 = vld [vmem:[%s3 + $0x10] sm:$0xf]
    %v1032 = vld [vmem:[%s3 + $0x14] sm:$0xf]
    %v1033 = vld [vmem:[%s3 + $0x18] sm:$0xf]
    %v1034 = vld [vmem:[%s3 + $0x1c] sm:$0xf]
    %v1035 = vld [vmem:[%s3 + $0x20] sm:$0xf]
    %v1036 = vld [vmem:[%s3 + $0x24] sm:$0xf]
    %v1037 = vld [vmem:[%s3 + $0x28] sm:$0xf]
    %v1038 = vld [vmem:[%s3 + $0x2c] sm:$0xf]
    %v1039 = vld [vmem:[%s3 + $0x30] sm:$0xf]
    %v1040 = vld [vmem:[%s3 + $0x34] sm:$0xf]
    %v1041 = vld [vmem:[%s3 + $0x38] sm:$0xf]
    %v1042 = vld [vmem:[%s3 + $0x3c] sm:$0xf]
    %v1059 = vunpack.c.l.b16 %v1027
    %v1060 = vunpack.c.l.b16 %v1028
    %v1061 = vunpack.c.l.b16 %v1029
    %v1062 = vunpack.c.l.b16 %v1030
    %v1063 = vunpack.c.l.b16 %v1031
    %v1064 = vunpack.c.l.b16 %v1032
    %v1065 = vunpack.c.l.b16 %v1033
    %v1066 = vunpack.c.l.b16 %v1034
    %v1067 = vunpack.c.l.b16 %v1035
    %v1068 = vunpack.c.l.b16 %v1036
    %v1069 = vunpack.c.l.b16 %v1037
    %v1070 = vunpack.c.l.b16 %v1038
    %v1071 = vunpack.c.l.b16 %v1039
    %v1072 = vunpack.c.l.b16 %v1040
    %v1073 = vunpack.c.l.b16 %v1041
    %v1074 = vunpack.c.l.b16 %v1042
    %v1075 = vpack.c.b16 %v1060, %v1059
    %v1076 = vpack.c.b16 %v1062, %v1061
    %v1077 = vpack.c.b16 %v1064, %v1063
    %v1078 = vpack.c.b16 %v1066, %v1065
    %v1079 = vpack.c.b16 %v1068, %v1067
    %v1080 = vpack.c.b16 %v1070, %v1069
    %v1081 = vpack.c.b16 %v1072, %v1071
    %v1082 = vpack.c.b16 %v1074, %v1073
    %1091 = vmatprep.subr.bf16.mxu0 0
    %1092 = vmatpush1.bf16.msra.mxu0 %v1082
    %1093 = vmatprep.subr.bf16.mxu0 0
    %1094 = vmatpush1.bf16.msra.mxu0 %v1081
    %1095 = vmatprep.subr.bf16.mxu0 0
    %1096 = vmatpush1.bf16.msra.mxu0 %v1080
    %1097 = vmatprep.subr.bf16.mxu0 0
    %1098 = vmatpush1.bf16.msra.mxu0 %v1079
    %1099 = vmatprep.subr.bf16.mxu0 0
    %1100 = vmatpush1.bf16.msra.mxu0 %v1078
    %1101 = vmatprep.subr.bf16.mxu0 0
    %1102 = vmatpush1.bf16.msra.mxu0 %v1077
    %1103 = vmatprep.subr.bf16.mxu0 0
    %1104 = vmatpush1.bf16.msra.mxu0 %v1076
    %1105 = vmatprep.subr.bf16.mxu0 0
    %1106 = vmatpush1.bf16.msra.mxu0 %v1075
    %1107 = vmatprep.subr.bf16.mxu0 0
    %1108 = vmatpush2.bf16.msra.mxu0 0
    %1109 = vmatprep.subr.bf16.mxu0 0
    %1110 = vmatpush2.bf16.msra.mxu0 0
    %1111 = vmatprep.subr.bf16.mxu0 0
    %1112 = vmatpush2.bf16.msra.mxu0 0
    %1113 = vmatprep.subr.bf16.mxu0 0
    %1114 = vmatpush2.bf16.msra.mxu0 0
    %1115 = vmatprep.subr.bf16.mxu0 0
    %1116 = vmatpush2.bf16.msra.mxu0 0
    %1117 = vmatprep.subr.bf16.mxu0 0
    %1118 = vmatpush2.bf16.msra.mxu0 0
    %1119 = vmatprep.subr.bf16.mxu0 0
    %1120 = vmatpush2.bf16.msra.mxu0 0
    %1121 = vmatprep.subr.bf16.mxu0 0
    %1122 = vmatpush2.bf16.msra.mxu0 0
    %1123 = vmatprep.mubr.bf16.mxu0 0
    %1124 = vmatmul.mubr.bf16.gmra.mxu0 %v1023
    %v1125 = vpop.f32.mrf.mxu0
    %v1126 = vadd.f32 0.0, %v1125
    %v1127 = vpop.f32.mrf.mxu0
    %v1128 = vpop.f32.mrf.mxu0
    %v1129 = vadd.f32 0.0, %v1128
    %v1130 = vpop.f32.mrf.mxu0
    %1131 = vmatprep.mubr.bf16.mxu0 0
    %1132 = vmatmul.mubr.bf16.gmra.mxu0 %v1024
    %v1133 = vpop.f32.mrf.mxu0
    %v1134 = vadd.f32 0.0, %v1133
    %v1135 = vpop.f32.mrf.mxu0
    %v1136 = vpop.f32.mrf.mxu0
    %v1137 = vadd.f32 0.0, %v1136
    %v1138 = vpop.f32.mrf.mxu0
    %1139 = vmatprep.mubr.bf16.mxu0 0
    %1140 = vmatmul.mubr.bf16.gmra.mxu0 %v1025
    %v1141 = vpop.f32.mrf.mxu0
    %v1142 = vadd.f32 0.0, %v1141
    %v1143 = vpop.f32.mrf.mxu0
    %v1144 = vpop.f32.mrf.mxu0
    %v1145 = vadd.f32 0.0, %v1144
    %v1146 = vpop.f32.mrf.mxu0
    %1147 = vmatprep.mubr.bf16.mxu0 0
    %1148 = vmatmul.mubr.bf16.gmra.mxu0 %v1026
    %v1149 = vpop.f32.mrf.mxu0
    %v1150 = vadd.f32 0.0, %v1149
    %v1151 = vpop.f32.mrf.mxu0
    %v1152 = vpop.f32.mrf.mxu0
    %v1153 = vadd.f32 0.0, %v1152
    %v1154 = vpop.f32.mrf.mxu0
    %1155 = vdwg.mxu0
    %1164 = vrot.lane.b32.xlu0 %v1126, 120
    %v1165 = vpop.permute.xlu0 %1164
    %1166 = vrot.lane.b32.xlu0 %v1129, 120
    %v1167 = vpop.permute.xlu0 %1166
    %1168 = vrot.lane.b32.xlu0 %v1134, 120
    %v1169 = vpop.permute.xlu0 %1168
    %1170 = vrot.lane.b32.xlu0 %v1137, 120
    %v1171 = vpop.permute.xlu0 %1170
    %1172 = vrot.lane.b32.xlu0 %v1142, 120
    %v1173 = vpop.permute.xlu0 %1172
    %1174 = vrot.lane.b32.xlu0 %v1145, 120
    %v1175 = vpop.permute.xlu0 %1174
    %1176 = vrot.lane.b32.xlu0 %v1150, 120
    %v1177 = vpop.permute.xlu0 %1176
    %1178 = vrot.lane.b32.xlu0 %v1153, 120
    %v1179 = vpop.permute.xlu0 %1178
    %1188 = vxpose.xlu0.b32.start [1/16] %v1165, 128
    %1189 = vxpose.xlu0.b32.cont [2/16] %v1167, 128
    %1190 = vxpose.xlu0.b32.cont [3/16] %v1169, 128
    %1191 = vxpose.xlu0.b32.cont [4/16] %v1171, 128
    %1192 = vxpose.xlu0.b32.cont [5/16] %v1173, 128
    %1193 = vxpose.xlu0.b32.cont [6/16] %v1175, 128
    %1194 = vxpose.xlu0.b32.cont [7/16] %v1177, 128
    %1195 = vxpose.xlu0.b32.cont [8/16] %v1179, 128
    %1196 = vxpose.xlu0.b32.cont [9/16] 0.0, 128
    %1197 = vxpose.xlu0.b32.cont [10/16] 0.0, 128
    %1198 = vxpose.xlu0.b32.cont [11/16] 0.0, 128
    %1199 = vxpose.xlu0.b32.cont [12/16] 0.0, 128
    %1200 = vxpose.xlu0.b32.cont [13/16] 0.0, 128
    %1201 = vxpose.xlu0.b32.cont [14/16] 0.0, 128
    %1202 = vxpose.xlu0.b32.cont [15/16] 0.0, 128
    %1203 = vxpose.xlu0.b32.end [16/16] 0.0, 128
    %v1204 = vpop.trf.xlu0
    %v1205 = vpop.trf.xlu0
    %v1206 = vpop.trf.xlu0
    %v1207 = vpop.trf.xlu0
    %v1208 = vpop.trf.xlu0
    %v1209 = vpop.trf.xlu0
    %v1210 = vpop.trf.xlu0
    %v1211 = vpop.trf.xlu0
    %v1212 = vpop.trf.xlu0
    %v1213 = vpop.trf.xlu0
    %v1214 = vpop.trf.xlu0
    %v1215 = vpop.trf.xlu0
    %v1216 = vpop.trf.xlu0
    %v1217 = vpop.trf.xlu0
    %v1218 = vpop.trf.xlu0
    %v1219 = vpop.trf.xlu0
    %1220 = vset.pattern.permute.xlu0 8
    %1221 = vperm.xlu0 %1220, %v1126
    %v1222 = vpop.permute.xlu0 %1221
    %1224 = vset.pattern.permute.xlu0 8
    %1225 = vperm.xlu0 %1224, %v1129
    %v1226 = vpop.permute.xlu0 %1225
    %1228 = vset.pattern.permute.xlu0 8
    %1229 = vperm.xlu0 %1228, %v1134
    %v1230 = vpop.permute.xlu0 %1229
    %1232 = vset.pattern.permute.xlu0 8
    %1233 = vperm.xlu0 %1232, %v1137
    %v1234 = vpop.permute.xlu0 %1233
    %1236 = vset.pattern.permute.xlu0 8
    %1237 = vperm.xlu0 %1236, %v1142
    %v1238 = vpop.permute.xlu0 %1237
    %1240 = vset.pattern.permute.xlu0 8
    %1241 = vperm.xlu0 %1240, %v1145
    %v1242 = vpop.permute.xlu0 %1241
    %1244 = vset.pattern.permute.xlu0 8
    %1245 = vperm.xlu0 %1244, %v1150
    %v1246 = vpop.permute.xlu0 %1245
    %1248 = vset.pattern.permute.xlu0 8
    %1249 = vperm.xlu0 %1248, %v1153
    %v1250 = vpop.permute.xlu0 %1249
    %v1252 = vlaneseq
    %v1253 = vshrl.u32 %v1252, 7
    %v1254 = vsub.s32 1, %v1253
    %v1255 = vrot.slane %v1204, %v1254
    %v1256 = vadd.f32 %v1222, %v1255
    %v1257 = vadd.f32 %v1226, %v1255
    %v1258 = vadd.f32 %v1230, %v1255
    %v1259 = vadd.f32 %v1234, %v1255
    %v1260 = vadd.f32 %v1238, %v1255
    %v1261 = vadd.f32 %v1242, %v1255
    %v1262 = vadd.f32 %v1246, %v1255
    %v1263 = vadd.f32 %v1250, %v1255
    %vm1264 = vcmp.gt.f32.partialorder %v1256, 0.0
    %vm1265 = vcmp.gt.f32.partialorder %v1257, 0.0
    %vm1266 = vcmp.gt.f32.partialorder %v1258, 0.0
    %vm1267 = vcmp.gt.f32.partialorder %v1259, 0.0
    %vm1268 = vcmp.gt.f32.partialorder %v1260, 0.0
    %vm1269 = vcmp.gt.f32.partialorder %v1261, 0.0
    %vm1270 = vcmp.gt.f32.partialorder %v1262, 0.0
    %vm1271 = vcmp.gt.f32.partialorder %v1263, 0.0
    %v1272 = vmul.f32 %v1256, 0.2
    %v1273 = vmul.f32 %v1257, 0.2
    %v1274 = vmul.f32 %v1258, 0.2
    %v1275 = vmul.f32 %v1259, 0.2
    %v1276 = vmul.f32 %v1260, 0.2
    %v1277 = vmul.f32 %v1261, 0.2
    %v1278 = vmul.f32 %v1262, 0.2
    %v1279 = vmul.f32 %v1263, 0.2
    %v1280 = vsel %vm1264, %v1256, %v1272
    %v1281 = vsel %vm1265, %v1257, %v1273
    %v1282 = vsel %vm1266, %v1258, %v1274
    %v1283 = vsel %vm1267, %v1259, %v1275
    %v1284 = vsel %vm1268, %v1260, %v1276
    %v1285 = vsel %vm1269, %v1261, %v1277
    %v1286 = vsel %vm1270, %v1262, %v1278
    %v1287 = vsel %vm1271, %v1263, %v1279
    %v1288 = vsub.f32 0.0, %v1280
    %v1289 = vsub.f32 0.0, %v1281
    %v1290 = vsub.f32 0.0, %v1282
    %v1291 = vsub.f32 0.0, %v1283
    %v1292 = vsub.f32 0.0, %v1284
    %v1293 = vsub.f32 0.0, %v1285
    %v1294 = vsub.f32 0.0, %v1286
    %v1295 = vsub.f32 0.0, %v1287
    %v1296 = vmul.f32 %v1288, 1.442695
    %v1297 = vpow.pop %v1296
    %v1298 = vmul.f32 %v1289, 1.442695
    %v1299 = vpow.pop %v1298
    %v1300 = vmul.f32 %v1290, 1.442695
    %v1301 = vpow.pop %v1300
    %v1302 = vmul.f32 %v1291, 1.442695
    %v1303 = vpow.pop %v1302
    %v1304 = vmul.f32 %v1292, 1.442695
    %v1305 = vpow.pop %v1304
    %v1306 = vmul.f32 %v1293, 1.442695
    %v1307 = vpow.pop %v1306
    %v1308 = vmul.f32 %v1294, 1.442695
    %v1309 = vpow.pop %v1308
    %v1310 = vmul.f32 %v1295, 1.442695
    %v1311 = vpow.pop %v1310
    %v1312 = vsel %vm41, %v1297, 0.0
    %v1313 = vsel %vm42, %v1299, 0.0
    %v1314 = vsel %vm43, %v1301, 0.0
    %v1315 = vsel %vm44, %v1303, 0.0
    %v1316 = vsel %vm45, %v1305, 0.0
    %v1317 = vsel %vm46, %v1307, 0.0
    %v1318 = vsel %vm47, %v1309, 0.0
    %v1319 = vsel %vm48, %v1311, 0.0
    %v1320 = vsel %vm309, %v1312, 0.0
    %1321 = vadd.xlane.f32.xlu0 %v1320
    %v1322 = vpop.xlane.xlu0 %1321
    %v1323 = vsel %vm309, %v1313, 0.0
    %1324 = vadd.xlane.f32.xlu0 %v1323
    %v1325 = vpop.xlane.xlu0 %1324
    %v1326 = vsel %vm309, %v1314, 0.0
    %1327 = vadd.xlane.f32.xlu0 %v1326
    %v1328 = vpop.xlane.xlu0 %1327
    %v1329 = vsel %vm309, %v1315, 0.0
    %1330 = vadd.xlane.f32.xlu0 %v1329
    %v1331 = vpop.xlane.xlu0 %1330
    %v1332 = vsel %vm309, %v1316, 0.0
    %1333 = vadd.xlane.f32.xlu0 %v1332
    %v1334 = vpop.xlane.xlu0 %1333
    %v1335 = vsel %vm309, %v1317, 0.0
    %1336 = vadd.xlane.f32.xlu0 %v1335
    %v1337 = vpop.xlane.xlu0 %1336
    %v1338 = vsel %vm309, %v1318, 0.0
    %1339 = vadd.xlane.f32.xlu0 %v1338
    %v1340 = vpop.xlane.xlu0 %1339
    %v1341 = vsel %vm309, %v1319, 0.0
    %1342 = vadd.xlane.f32.xlu0 %v1341
    %v1343 = vpop.xlane.xlu0 %1342
    %v1344 = vrcp.pop %v1322
    %v1345 = vmul.f32 1.0, %v1344
    %v1346 = vrcp.pop %v1325
    %v1347 = vmul.f32 1.0, %v1346
    %v1348 = vrcp.pop %v1328
    %v1349 = vmul.f32 1.0, %v1348
    %v1350 = vrcp.pop %v1331
    %v1351 = vmul.f32 1.0, %v1350
    %v1352 = vrcp.pop %v1334
    %v1353 = vmul.f32 1.0, %v1352
    %v1354 = vrcp.pop %v1337
    %v1355 = vmul.f32 1.0, %v1354
    %v1356 = vrcp.pop %v1340
    %v1357 = vmul.f32 1.0, %v1356
    %v1358 = vrcp.pop %v1343
    %v1359 = vmul.f32 1.0, %v1358
    %v1360 = vmul.f32 %v1312, %v1345
    %v1361 = vmul.f32 %v1313, %v1347
    %v1362 = vmul.f32 %v1314, %v1349
    %v1363 = vmul.f32 %v1315, %v1351
    %v1364 = vmul.f32 %v1316, %v1353
    %v1365 = vmul.f32 %v1317, %v1355
    %v1366 = vmul.f32 %v1318, %v1357
    %v1367 = vmul.f32 %v1319, %v1359
    %v1368 = vpack.c.bf16 %v1361, %v1360
    %v1369 = vpack.c.bf16 %v1363, %v1362
    %v1370 = vpack.c.bf16 %v1365, %v1364
    %v1371 = vpack.c.bf16 %v1367, %v1366
    %v1372 = vpack.c.bf16 %v1129, %v1126
    %v1373 = vpack.c.bf16 %v1137, %v1134
    %v1374 = vpack.c.bf16 %v1145, %v1142
    %v1375 = vpack.c.bf16 %v1153, %v1150
    %v1377 = vsel %vm309, %v1368, 0
    %v1380 = vsel %vm309, %v1369, 0
    %v1383 = vsel %vm309, %v1370, 0
    %v1386 = vsel %vm309, %v1371, 0
    %1388 = vmatprep.subr.bf16.mxu0 0
    %1389 = vmatpush1.bf16.msra.mxu0 0
    %1390 = vmatprep.subr.bf16.mxu0 0
    %1391 = vmatpush1.bf16.msra.mxu0 0
    %1392 = vmatprep.subr.bf16.mxu0 0
    %1393 = vmatpush1.bf16.msra.mxu0 0
    %1394 = vmatprep.subr.bf16.mxu0 0
    %1395 = vmatpush1.bf16.msra.mxu0 0
    %1396 = vmatprep.subr.bf16.mxu0 0
    %1397 = vmatpush1.bf16.msra.mxu0 %v1375
    %1398 = vmatprep.subr.bf16.mxu0 0
    %1399 = vmatpush1.bf16.msra.mxu0 %v1374
    %1400 = vmatprep.subr.bf16.mxu0 0
    %1401 = vmatpush1.bf16.msra.mxu0 %v1373
    %1402 = vmatprep.subr.bf16.mxu0 0
    %1403 = vmatpush1.bf16.msra.mxu0 %v1372
    %1404 = vmatprep.subr.bf16.mxu0 0
    %1405 = vmatpush2.bf16.msra.mxu0 0
    %1406 = vmatprep.subr.bf16.mxu0 0
    %1407 = vmatpush2.bf16.msra.mxu0 0
    %1408 = vmatprep.subr.bf16.mxu0 0
    %1409 = vmatpush2.bf16.msra.mxu0 0
    %1410 = vmatprep.subr.bf16.mxu0 0
    %1411 = vmatpush2.bf16.msra.mxu0 0
    %1412 = vmatprep.subr.bf16.mxu0 0
    %1413 = vmatpush2.bf16.msra.mxu0 0
    %1414 = vmatprep.subr.bf16.mxu0 0
    %1415 = vmatpush2.bf16.msra.mxu0 0
    %1416 = vmatprep.subr.bf16.mxu0 0
    %1417 = vmatpush2.bf16.msra.mxu0 0
    %1418 = vmatprep.subr.bf16.mxu0 0
    %1419 = vmatpush2.bf16.msra.mxu0 0
    %1420 = vmatprep.mubr.bf16.mxu0 0
    %1421 = vmatmul.mubr.bf16.gmra.mxu0 %v1377
    %v1422 = vpop.f32.mrf.mxu0
    %v1423 = vadd.f32 0.0, %v1422
    %v1424 = vpop.f32.mrf.mxu0
    %v1425 = vpop.f32.mrf.mxu0
    %v1426 = vadd.f32 0.0, %v1425
    %v1427 = vpop.f32.mrf.mxu0
    %1428 = vmatprep.mubr.bf16.mxu0 0
    %1429 = vmatmul.mubr.bf16.gmra.mxu0 %v1380
    %v1430 = vpop.f32.mrf.mxu0
    %v1431 = vadd.f32 0.0, %v1430
    %v1432 = vpop.f32.mrf.mxu0
    %v1433 = vpop.f32.mrf.mxu0
    %v1434 = vadd.f32 0.0, %v1433
    %v1435 = vpop.f32.mrf.mxu0
    %1436 = vmatprep.mubr.bf16.mxu0 0
    %1437 = vmatmul.mubr.bf16.gmra.mxu0 %v1383
    %v1438 = vpop.f32.mrf.mxu0
    %v1439 = vadd.f32 0.0, %v1438
    %v1440 = vpop.f32.mrf.mxu0
    %v1441 = vpop.f32.mrf.mxu0
    %v1442 = vadd.f32 0.0, %v1441
    %v1443 = vpop.f32.mrf.mxu0
    %1444 = vmatprep.mubr.bf16.mxu0 0
    %1445 = vmatmul.mubr.bf16.gmra.mxu0 %v1386
    %v1446 = vpop.f32.mrf.mxu0
    %v1447 = vadd.f32 0.0, %v1446
    %v1448 = vpop.f32.mrf.mxu0
    %v1449 = vpop.f32.mrf.mxu0
    %v1450 = vadd.f32 0.0, %v1449
    %v1451 = vpop.f32.mrf.mxu0
    %1452 = vdwg.mxu0
    %vm1453 = vcmp.gt.f32.partialorder %v1423, 0.0
    %vm1454 = vcmp.gt.f32.partialorder %v1426, 0.0
    %vm1455 = vcmp.gt.f32.partialorder %v1431, 0.0
    %vm1456 = vcmp.gt.f32.partialorder %v1434, 0.0
    %vm1457 = vcmp.gt.f32.partialorder %v1439, 0.0
    %vm1458 = vcmp.gt.f32.partialorder %v1442, 0.0
    %vm1459 = vcmp.gt.f32.partialorder %v1447, 0.0
    %vm1460 = vcmp.gt.f32.partialorder %v1450, 0.0
    %v1461 = vmul.f32 %v1423, 1.442695
    %v1462 = vpow.pop %v1461
    %v1463 = vmul.f32 %v1426, 1.442695
    %v1464 = vpow.pop %v1463
    %v1465 = vmul.f32 %v1431, 1.442695
    %v1466 = vpow.pop %v1465
    %v1467 = vmul.f32 %v1434, 1.442695
    %v1468 = vpow.pop %v1467
    %v1469 = vmul.f32 %v1439, 1.442695
    %v1470 = vpow.pop %v1469
    %v1471 = vmul.f32 %v1442, 1.442695
    %v1472 = vpow.pop %v1471
    %v1473 = vmul.f32 %v1447, 1.442695
    %v1474 = vpow.pop %v1473
    %v1475 = vmul.f32 %v1450, 1.442695
    %v1476 = vpow.pop %v1475
    %v1477 = vsub.f32 %v1462, 1.0
    %v1478 = vsub.f32 %v1464, 1.0
    %v1479 = vsub.f32 %v1466, 1.0
    %v1480 = vsub.f32 %v1468, 1.0
    %v1481 = vsub.f32 %v1470, 1.0
    %v1482 = vsub.f32 %v1472, 1.0
    %v1483 = vsub.f32 %v1474, 1.0
    %v1484 = vsub.f32 %v1476, 1.0
    %v1485 = vsel %vm1453, %v1423, %v1477
    %v1486 = vsel %vm1454, %v1426, %v1478
    %v1487 = vsel %vm1455, %v1431, %v1479
    %v1488 = vsel %vm1456, %v1434, %v1480
    %v1489 = vsel %vm1457, %v1439, %v1481
    %v1490 = vsel %vm1458, %v1442, %v1482
    %v1491 = vsel %vm1459, %v1447, %v1483
    %v1492 = vsel %vm1460, %v1450, %v1484
    %vm1493 = vcmp.lt.s32.totalorder %v208, 8
    %v1494 = vsel %vm1493, %v1485, -inf
    %v1495 = vsel %vm1493, %v1486, -inf
    %v1496 = vsel %vm1493, %v1487, -inf
    %v1497 = vsel %vm1493, %v1488, -inf
    %v1498 = vsel %vm1493, %v1489, -inf
    %v1499 = vsel %vm1493, %v1490, -inf
    %v1500 = vsel %vm1493, %v1491, -inf
    %v1501 = vsel %vm1493, %v1492, -inf
    %1502 = vmax.xlane.f32.xlu0 %v1494
    %v1503 = vpop.xlane.xlu0 %1502
    %1504 = vmax.xlane.f32.xlu0 %v1495
    %v1505 = vpop.xlane.xlu0 %1504
    %1506 = vmax.xlane.f32.xlu0 %v1496
    %v1507 = vpop.xlane.xlu0 %1506
    %1508 = vmax.xlane.f32.xlu0 %v1497
    %v1509 = vpop.xlane.xlu0 %1508
    %1510 = vmax.xlane.f32.xlu0 %v1498
    %v1511 = vpop.xlane.xlu0 %1510
    %1512 = vmax.xlane.f32.xlu0 %v1499
    %v1513 = vpop.xlane.xlu0 %1512
    %1514 = vmax.xlane.f32.xlu0 %v1500
    %v1515 = vpop.xlane.xlu0 %1514
    %1516 = vmax.xlane.f32.xlu0 %v1501
    %v1517 = vpop.xlane.xlu0 %1516
    %v1518 = vsub.f32 %v1494, %v1503
    %v1519 = vsub.f32 %v1495, %v1505
    %v1520 = vsub.f32 %v1496, %v1507
    %v1521 = vsub.f32 %v1497, %v1509
    %v1522 = vsub.f32 %v1498, %v1511
    %v1523 = vsub.f32 %v1499, %v1513
    %v1524 = vsub.f32 %v1500, %v1515
    %v1525 = vsub.f32 %v1501, %v1517
    %v1526 = vmul.f32 %v1518, 1.442695
    %v1527 = vpow.pop %v1526
    %v1528 = vmul.f32 %v1519, 1.442695
    %v1529 = vpow.pop %v1528
    %v1530 = vmul.f32 %v1520, 1.442695
    %v1531 = vpow.pop %v1530
    %v1532 = vmul.f32 %v1521, 1.442695
    %v1533 = vpow.pop %v1532
    %v1534 = vmul.f32 %v1522, 1.442695
    %v1535 = vpow.pop %v1534
    %v1536 = vmul.f32 %v1523, 1.442695
    %v1537 = vpow.pop %v1536
    %v1538 = vmul.f32 %v1524, 1.442695
    %v1539 = vpow.pop %v1538
    %v1540 = vmul.f32 %v1525, 1.442695
    %v1541 = vpow.pop %v1540
    %1542 = vadd.xlane.f32.xlu0 %v1527
    %v1543 = vpop.xlane.xlu0 %1542
    %1544 = vadd.xlane.f32.xlu0 %v1529
    %v1545 = vpop.xlane.xlu0 %1544
    %1546 = vadd.xlane.f32.xlu0 %v1531
    %v1547 = vpop.xlane.xlu0 %1546
    %1548 = vadd.xlane.f32.xlu0 %v1533
    %v1549 = vpop.xlane.xlu0 %1548
    %1550 = vadd.xlane.f32.xlu0 %v1535
    %v1551 = vpop.xlane.xlu0 %1550
    %1552 = vadd.xlane.f32.xlu0 %v1537
    %v1553 = vpop.xlane.xlu0 %1552
    %1554 = vadd.xlane.f32.xlu0 %v1539
    %v1555 = vpop.xlane.xlu0 %1554
    %1556 = vadd.xlane.f32.xlu0 %v1541
    %v1557 = vpop.xlane.xlu0 %1556
    %v1558 = vlog2.pop %v1543
    %v1559 = vmul.f32 %v1558, 0.6931472
    %v1560 = vlog2.pop %v1545
    %v1561 = vmul.f32 %v1560, 0.6931472
    %v1562 = vlog2.pop %v1547
    %v1563 = vmul.f32 %v1562, 0.6931472
    %v1564 = vlog2.pop %v1549
    %v1565 = vmul.f32 %v1564, 0.6931472
    %v1566 = vlog2.pop %v1551
    %v1567 = vmul.f32 %v1566, 0.6931472
    %v1568 = vlog2.pop %v1553
    %v1569 = vmul.f32 %v1568, 0.6931472
    %v1570 = vlog2.pop %v1555
    %v1571 = vmul.f32 %v1570, 0.6931472
    %v1572 = vlog2.pop %v1557
    %v1573 = vmul.f32 %v1572, 0.6931472
    %v1574 = vadd.f32 %v1559, %v1503
    %v1575 = vadd.f32 %v1561, %v1505
    %v1576 = vadd.f32 %v1563, %v1507
    %v1577 = vadd.f32 %v1565, %v1509
    %v1578 = vadd.f32 %v1567, %v1511
    %v1579 = vadd.f32 %v1569, %v1513
    %v1580 = vadd.f32 %v1571, %v1515
    %v1581 = vadd.f32 %v1573, %v1517
    %v1582 = vsub.f32 %v1485, %v1574
    %v1583 = vsub.f32 %v1486, %v1575
    %v1584 = vsub.f32 %v1487, %v1576
    %v1585 = vsub.f32 %v1488, %v1577
    %v1586 = vsub.f32 %v1489, %v1578
    %v1587 = vsub.f32 %v1490, %v1579
    %v1588 = vsub.f32 %v1491, %v1580
    %v1589 = vsub.f32 %v1492, %v1581
    %v1590 = vsel %vm1493, %v1582, 0.0
    %v1591 = vsel %vm1493, %v1583, 0.0
    %v1592 = vsel %vm1493, %v1584, 0.0
    %v1593 = vsel %vm1493, %v1585, 0.0
    %v1594 = vsel %vm1493, %v1586, 0.0
    %v1595 = vsel %vm1493, %v1587, 0.0
    %v1596 = vsel %vm1493, %v1588, 0.0
    %v1597 = vsel %vm1493, %v1589, 0.0
    %1598 = vst [vmem:[#allocation2] sm:$0xff] %v1590
    %1599 = vst [vmem:[#allocation2 + $0x8] sm:$0xff] %v1591
    %1600 = vst [vmem:[#allocation2 + $0x10] sm:$0xff] %v1592
    %1601 = vst [vmem:[#allocation2 + $0x18] sm:$0xff] %v1593
    %1602 = vst [vmem:[#allocation2 + $0x20] sm:$0xff] %v1594
    %1603 = vst [vmem:[#allocation2 + $0x28] sm:$0xff] %v1595
    %1604 = vst [vmem:[#allocation2 + $0x30] sm:$0xff] %v1596
    %1605 = vst [vmem:[#allocation2 + $0x38] sm:$0xff] %v1597
    // Predicated region
    $region18: #{tpu_custom_call.1} parent=1 // pred_check
      _
    $region19: #{tpu_custom_call.1} parent=1 // pred_check_branch
      %1607 = sbr.rel (0) target = $region21
    $region20: #{tpu_custom_call.1} parent=1 // pred_region
      %s1609 = ssub.s32 1024, 1024
      %1610 = vsyncadd [#allocation3], %s1609
      %s1611 = sshll.u32 [#allocation2], 4
      %s1612 = int_to_ptr.vmem [resolvable:$true] %s1611
      %1617 = dma.vmem_to_hbm [thread:$0]  %s1612, 1024, %s4, [#allocation3], 128, 128, 8
    $region21: #{tpu_custom_call.1} parent=1 // pred_fallthru
      _
    // Predicated region
    $region22: #{tpu_custom_call.1} parent=1 // pred_check
      _
    $region23: #{tpu_custom_call.1} parent=1 // pred_check_branch
      %1619 = sbr.rel (0) target = $region25
    $region24: #{tpu_custom_call.1} parent=1 // pred_region
      %1620 = dma.done [#allocation3], 1024
    $region25: #{tpu_custom_call.1} parent=1 // pred_fallthru
      _
    %1621 = vsyncpa [#allocation3], 1

</llo_original>
